<compile_context>
chip_gen: v7x
topology: tpu7x:2x2x1
jax: 0.10.0
libtpu: 0.0.40
codegen_flags: <defaults>
</compile_context>

<pallas_src>
import functools

import jax
import jax.numpy as jnp
from jax.experimental import pallas as pl
from jax.experimental.pallas import tpu as pltpu

_LANE = 128
_MAX_TILE_M = 2048   # lanes per grid step; largest slab tile = 144*2048*2B
                     # = 576 KB -> double-buffered inputs + output fit every
                     # generation's default scoped VMEM with big headroom.
_BN_EPS = 1e-5


def _ceil_to(x, d):
    return ((x + d - 1) // d) * d


# ----------------------------------------------------------------------------
# Pallas kernels
# ----------------------------------------------------------------------------
def _conv_kernel(slab_ref, w_ref, s_ref, b_ref, o_ref, *, relu):
    # slab: (K, TILE_M) bf16, w: (Cout, K) bf16, s/b: (Cout, 1) f32 folded BN.
    r = jnp.dot(w_ref[...], slab_ref[...], preferred_element_type=jnp.float32)
    if relu:
        r = jnp.maximum(r, 0.0)
    o_ref[...] = r * s_ref[...] + b_ref[...]


def _conv_bn_1x1_kernel(slab_ref, w_ref, s_ref, b_ref, wp_ref, o_ref):
    # conv(3x3) + ReLU + BN (f32 math), then the following 1x1 conv, fused.
    r = jnp.dot(w_ref[...], slab_ref[...], preferred_element_type=jnp.float32)
    r = jnp.maximum(r, 0.0)
    r = r * s_ref[...] + b_ref[...]
    o_ref[...] = jnp.dot(wp_ref[...], r.astype(wp_ref.dtype),
                         preferred_element_type=jnp.float32)


def _head_kernel(pooled_ref, w8_ref, o_ref):
    # 1x1 conv (16->10) on the GAP'd features + log_softmax over classes.
    # Output is (10, N) class-major; the wrapper transposes to (N, 10).
    logits = jnp.dot(w8_ref[...], pooled_ref[...],
                     preferred_element_type=jnp.float32)          # (10, N)
    m = jnp.max(logits, axis=0, keepdims=True)
    z = logits - m
    lse = jnp.log(jnp.sum(jnp.exp(z), axis=0, keepdims=True))
    o_ref[...] = z - lse


# ----------------------------------------------------------------------------
# pallas_call wrappers
# ----------------------------------------------------------------------------
def _conv_apply(kernel, cout, slab, params2d, *, mm_cols=None):
    """Tiled conv-style call.

    `slab` (K, M) is blocked along the lane axis M with a 128-multiple tile;
    the small 2-D `params2d` (weights, folded BN affines) get a constant
    index_map so they stay resident in VMEM across the grid.
    """
    k, m = slab.shape
    tile = min(_MAX_TILE_M, _ceil_to(m, _LANE))
    m_pad = _ceil_to(m, tile)
    if m_pad != m:
        slab = jnp.pad(slab, ((0, 0), (0, m_pad - m)))   # lane-dense blocks
    grid = (m_pad // tile,)

    in_specs = [pl.BlockSpec((k, tile), lambda i: (0, i))]
    for p in params2d:
        in_specs.append(pl.BlockSpec(p.shape, lambda i: (0, 0)))

    if mm_cols is None:
        mm_cols = cout * k                       # MACs per output column
    flops = 2 * mm_cols * m_pad
    bytes_acc = (slab.size * slab.dtype.itemsize
                 + sum(int(p.size) * p.dtype.itemsize for p in params2d)
                 + cout * m_pad * 4)

    out = pl.pallas_call(
        kernel,
        out_shape=jax.ShapeDtypeStruct((cout, m_pad), jnp.float32),
        grid=grid,
        in_specs=in_specs,
        out_specs=pl.BlockSpec((cout, tile), lambda i: (0, i)),
        compiler_params=pltpu.CompilerParams(
            dimension_semantics=("parallel",)),          # megacore on v7x
        cost_estimate=pl.CostEstimate(flops=int(flops), transcendentals=0,
                                      bytes_accessed=int(bytes_acc)),
    )(slab, *params2d)
    return out[:, :m]


def _head_apply(pooled, w8):
    """Single-step whole-block call for the tiny (16,N)->(10,N) head."""
    n = pooled.shape[1]

    def whole(shp):
        nd = len(shp)
        return pl.BlockSpec(shp, lambda i, nd=nd: (0,) * nd)

    return pl.pallas_call(
        _head_kernel,
        out_shape=jax.ShapeDtypeStruct((10, n), jnp.float32),
        grid=(1,),
        in_specs=[whole(pooled.shape), whole(w8.shape)],
        out_specs=whole((10, n)),
        compiler_params=pltpu.CompilerParams(
            dimension_semantics=("arbitrary",)),
    )(pooled, w8)


# ----------------------------------------------------------------------------
# XLA-side glue: channel-major im2col slab (shift + concat only), bf16 cast.
# ----------------------------------------------------------------------------
def _im2col_cm(x, kh, kw):
    """x: (C, N, H, W) channel-major f32. Returns (kh*kw*C, N*OH*OW) bf16."""
    C, N, H, W = x.shape
    OH, OW = H - kh + 1, W - kw + 1
    slabs = [
        x[:, :, ky:ky + OH, kx:kx + OW].reshape(C, N * OH * OW)
        for ky in range(kh) for kx in range(kw)
    ]
    return jnp.concatenate(slabs, axis=0).astype(jnp.bfloat16)


# ----------------------------------------------------------------------------
# Parameters (deterministic, PyTorch-equivalent shapes, kernel-ready layout).
# ----------------------------------------------------------------------------
def _conv_w(key, kh, kw, cin, cout, dtype=jnp.bfloat16):
    # PyTorch-default-like uniform init; layout (Cout, KH*KW*Cin), row order
    # (ky, kx, cin) matching the im2col slab row order.
    bound = 1.0 / float(cin * kh * kw) ** 0.5
    w = jax.random.uniform(key, (kh, kw, cin, cout), jnp.float32, -bound, bound)
    return jnp.transpose(w, (3, 0, 1, 2)).reshape(cout, kh * kw * cin).astype(dtype)


def _bn_fold(key, c):
    """Folded eval-mode BatchNorm scale/bias of shape (c, 1), float32."""
    k1, k2, k3, k4 = jax.random.split(key, 4)
    gamma = 1.0 + 0.1 * jax.random.normal(k1, (c, 1), jnp.float32)
    beta = 0.1 * jax.random.normal(k2, (c, 1), jnp.float32)
    r_mean = 0.05 * jax.random.normal(k3, (c, 1), jnp.float32)
    r_var = 1.0 + 0.1 * jax.random.uniform(k4, (c, 1), jnp.float32)
    scale = gamma / jnp.sqrt(r_var + _BN_EPS)
    bias = beta - r_mean * scale
    return scale, bias


def init_params(key):
    ks = jax.random.split(key, 16)
    p = {}
    p["w1"] = _conv_w(ks[0], 3, 3, 1, 8)                    # (8, 9)    bf16
    p["w2"] = _conv_w(ks[1], 3, 3, 8, 16)                   # (16, 72)  bf16
    p["w3"] = _conv_w(ks[2], 1, 1, 16, 8)                   # (8, 16)   bf16
    p["w4"] = _conv_w(ks[3], 3, 3, 8, 16)                   # (16, 72)  bf16
    p["w5"] = _conv_w(ks[4], 3, 3, 16, 8)                   # (8, 144)  bf16
    p["w6"] = _conv_w(ks[5], 3, 3, 8, 16)                   # (16, 72)  bf16
    p["w7"] = _conv_w(ks[6], 3, 3, 16, 16)                  # (16, 144) bf16
    p["w8"] = _conv_w(ks[7], 1, 1, 16, 10, dtype=jnp.float32)  # (10, 16) f32
    p["bn2_s"], p["bn2_b"] = _bn_fold(ks[8], 16)
    p["bn4_s"], p["bn4_b"] = _bn_fold(ks[9], 16)
    p["bn5_s"], p["bn5_b"] = _bn_fold(ks[10], 8)
    p["bn6_s"], p["bn6_b"] = _bn_fold(ks[11], 16)
    p["bn7_s"], p["bn7_b"] = _bn_fold(ks[12], 16)
    # identity scale/bias for the BN-less convblock1
    p["id8_s"] = jnp.ones((8, 1), jnp.float32)
    p["id8_b"] = jnp.zeros((8, 1), jnp.float32)
    return p


# ----------------------------------------------------------------------------
# Forward pass.
# ----------------------------------------------------------------------------
def mnist_forward(x_nchw, p):
    """x_nchw: (N, 1, 28, 28) f32, like the PyTorch module. Returns (N, 10) log-probs."""
    N = x_nchw.shape[0]
    # NCHW -> CNHW is a pure reshape because C == 1 (no transpose emitted).
    x = x_nchw.reshape(1, N, 28, 28).astype(jnp.float32)

    relu_conv = functools.partial(_conv_kernel, relu=True)

    # convblock1: conv 3x3 (1->8) + ReLU
    s = _im2col_cm(x, 3, 3)                                          # (9, 676N)
    a = _conv_apply(relu_conv, 8, s, [p["w1"], p["id8_s"], p["id8_b"]])
    a = a.reshape(8, N, 26, 26)

    # convblock2 (conv 3x3 8->16 + ReLU + BN2) fused with convblock3 (1x1 16->8)
    s = _im2col_cm(a, 3, 3)                                          # (72, 576N)
    a = _conv_apply(_conv_bn_1x1_kernel, 8, s,
                    [p["w2"], p["bn2_s"], p["bn2_b"], p["w3"]],
                    mm_cols=16 * 72 + 8 * 16)
    a = a.reshape(8, N, 24, 24)

    # pool1: 2x2 max-pool BEFORE im2col (max commutes with im2col).
    a = jnp.maximum(jnp.maximum(a[:, :, 0::2, 0::2], a[:, :, 0::2, 1::2]),
                    jnp.maximum(a[:, :, 1::2, 0::2], a[:, :, 1::2, 1::2]))  # (8,N,12,12)

    # convblock4: conv 3x3 (8->16) + ReLU + BN4
    s = _im2col_cm(a, 3, 3)                                          # (72, 100N)
    a = _conv_apply(relu_conv, 16, s, [p["w4"], p["bn4_s"], p["bn4_b"]])
    a = a.reshape(16, N, 10, 10)

    # convblock5: conv 3x3 (16->8) + ReLU + BN5
    s = _im2col_cm(a, 3, 3)                                          # (144, 64N)
    a = _conv_apply(relu_conv, 8, s, [p["w5"], p["bn5_s"], p["bn5_b"]])
    a = a.reshape(8, N, 8, 8)

    # convblock6: conv 3x3 (8->16) + ReLU + BN6
    s = _im2col_cm(a, 3, 3)                                          # (72, 36N)
    a = _conv_apply(relu_conv, 16, s, [p["w6"], p["bn6_s"], p["bn6_b"]])
    a = a.reshape(16, N, 6, 6)

    # convblock7: conv 3x3 (16->16) + ReLU + BN7
    s = _im2col_cm(a, 3, 3)                                          # (144, 16N)
    a = _conv_apply(relu_conv, 16, s, [p["w7"], p["bn7_s"], p["bn7_b"]])
    a = a.reshape(16, N, 4, 4)

    # gap: 4x4 average pool -> (16, N).  Tiny O(N) reduction; no N^2 poolmat.
    pooled = jnp.mean(a, axis=(2, 3))

    # convblock8 (1x1 16->10) + log_softmax
    out_t = _head_apply(pooled, p["w8"])                             # (10, N)
    return out_t.T                                                   # (N, 10)


if __name__ == "__main__":
    key = jax.random.PRNGKey(0)
    params = init_params(key)
    x = jax.random.normal(jax.random.fold_in(key, 999), (2, 1, 28, 28), jnp.float32)

    out = jax.jit(lambda xx: mnist_forward(xx, params))(x)
    out = jax.block_until_ready(out)

    assert out.shape == (2, 10), out.shape
    # rows are log-probabilities: exp(row) must sum to 1
    assert bool(jnp.all(jnp.isfinite(out)))
    assert bool(jnp.allclose(jnp.exp(out).sum(axis=-1), 1.0, atol=1e-4))
    print("KERNEL_OK")
</pallas_src>

<mosaic_0001>
module attributes {stable_mosaic.version = 11 : i64} {
  func.func @_conv_kernel(%arg0: i32, %arg1: memref<9x1408xbf16, #tpu.memory_space<vmem>>, %arg2: memref<8x9xbf16, #tpu.memory_space<vmem>>, %arg3: memref<8x1xf32, #tpu.memory_space<vmem>>, %arg4: memref<8x1xf32, #tpu.memory_space<vmem>>, %arg5: memref<8x1408xf32, #tpu.memory_space<vmem>>) attributes {dimension_semantics = [#tpu.dimension_semantics<parallel>], iteration_bounds = array<i64: 1>, scalar_prefetch = 0 : i64, scratch_operands = 0 : i64, tpu.core_type = #tpu.core_type<tc>, window_params = [{transform_indices = @transform_0, window_bounds = array<i64: 9, 1408>}, {pipeline_mode = #tpu.pipeline_mode<synchronous>, transform_indices = @transform_1, window_bounds = array<i64: 8, 9>}, {pipeline_mode = #tpu.pipeline_mode<synchronous>, transform_indices = @transform_2, window_bounds = array<i64: 8, 1>}, {pipeline_mode = #tpu.pipeline_mode<synchronous>, transform_indices = @transform_3, window_bounds = array<i64: 8, 1>}, {transform_indices = @transform_4, window_bounds = array<i64: 8, 1408>}]} {
    %c0 = arith.constant 0 : index
    %c0_0 = arith.constant 0 : index
    %0 = vector.load %arg2[%c0, %c0_0] : memref<8x9xbf16, #tpu.memory_space<vmem>>, vector<8x9xbf16>
    %c0_1 = arith.constant 0 : index
    %c0_2 = arith.constant 0 : index
    %1 = vector.load %arg1[%c0_1, %c0_2] : memref<9x1408xbf16, #tpu.memory_space<vmem>>, vector<9x1408xbf16>
    %cst = arith.constant dense<0.000000e+00> : vector<8x1408xf32>
    %2 = tpu.matmul %0, %1, %cst {dimension_numbers = #tpu.dot_dimension_numbers<[1], [0], [0], [1], [0, 0, 1, 1], [], []>} : vector<8x9xbf16>, vector<9x1408xbf16>, vector<8x1408xf32> -> vector<8x1408xf32>
    %cst_3 = arith.constant 0.000000e+00 : f32
    %3 = vector.broadcast %cst_3 : f32 to vector<8x1408xf32>
    %4 = arith.maximumf %2, %3 : vector<8x1408xf32>
    %c0_4 = arith.constant 0 : index
    %c0_5 = arith.constant 0 : index
    %5 = vector.load %arg3[%c0_4, %c0_5] : memref<8x1xf32, #tpu.memory_space<vmem>>, vector<8x1xf32>
    %6 = vector.broadcast %5 : vector<8x1xf32> to vector<8x1408xf32>
    %7 = arith.mulf %4, %6 : vector<8x1408xf32>
    %c0_6 = arith.constant 0 : index
    %c0_7 = arith.constant 0 : index
    %8 = vector.load %arg4[%c0_6, %c0_7] : memref<8x1xf32, #tpu.memory_space<vmem>>, vector<8x1xf32>
    %9 = vector.broadcast %8 : vector<8x1xf32> to vector<8x1408xf32>
    %10 = arith.addf %7, %9 : vector<8x1408xf32>
    %c0_8 = arith.constant 0 : index
    %c0_9 = arith.constant 0 : index
    %11 = vector.load %arg5[%c0_8, %c0_9] : memref<8x1408xf32, #tpu.memory_space<vmem>>, vector<8x1408xf32>
    tpu.vector_store %arg5[%c0_8, %c0_9], %10 {strides = array<i32>} : memref<8x1408xf32, #tpu.memory_space<vmem>>, vector<8x1408xf32>,
    return
  }
  func.func @transform_0(%arg0: i32) -> (i32, i32) {
    %c0_i32 = arith.constant 0 : i32
    %c0_i32_0 = arith.constant 0 : i32
    return %c0_i32, %arg0 : i32, i32
  }
  func.func @transform_1(%arg0: i32) -> (i32, i32) {
    %c0_i32 = arith.constant 0 : i32
    %c0_i32_0 = arith.constant 0 : i32
    %c0_i32_1 = arith.constant 0 : i32
    return %c0_i32, %c0_i32_0 : i32, i32
  }
  func.func @transform_2(%arg0: i32) -> (i32, i32) {
    %c0_i32 = arith.constant 0 : i32
    %c0_i32_0 = arith.constant 0 : i32
    %c0_i32_1 = arith.constant 0 : i32
    return %c0_i32, %c0_i32_0 : i32, i32
  }
  func.func @transform_3(%arg0: i32) -> (i32, i32) {
    %c0_i32 = arith.constant 0 : i32
    %c0_i32_0 = arith.constant 0 : i32
    %c0_i32_1 = arith.constant 0 : i32
    return %c0_i32, %c0_i32_0 : i32, i32
  }
  func.func @transform_4(%arg0: i32) -> (i32, i32) {
    %c0_i32 = arith.constant 0 : i32
    %c0_i32_0 = arith.constant 0 : i32
    return %c0_i32, %arg0 : i32, i32
  }
}

module attributes {stable_mosaic.version = 11 : i64} {
  func.func @_conv_bn_1x1_kernel(%arg0: i32, %arg1: memref<72x1152xbf16, #tpu.memory_space<vmem>>, %arg2: memref<16x72xbf16, #tpu.memory_space<vmem>>, %arg3: memref<16x1xf32, #tpu.memory_space<vmem>>, %arg4: memref<16x1xf32, #tpu.memory_space<vmem>>, %arg5: memref<8x16xbf16, #tpu.memory_space<vmem>>, %arg6: memref<8x1152xf32, #tpu.memory_space<vmem>>) attributes {dimension_semantics = [#tpu.dimension_semantics<parallel>], iteration_bounds = array<i64: 1>, scalar_prefetch = 0 : i64, scratch_operands = 0 : i64, tpu.core_type = #tpu.core_type<tc>, window_params = [{transform_indices = @transform_0, window_bounds = array<i64: 72, 1152>}, {pipeline_mode = #tpu.pipeline_mode<synchronous>, transform_indices = @transform_1, window_bounds = array<i64: 16, 72>}, {pipeline_mode = #tpu.pipeline_mode<synchronous>, transform_indices = @transform_2, window_bounds = array<i64: 16, 1>}, {pipeline_mode = #tpu.pipeline_mode<synchronous>, transform_indices = @transform_3, window_bounds = array<i64: 16, 1>}, {pipeline_mode = #tpu.pipeline_mode<synchronous>, transform_indices = @transform_4, window_bounds = array<i64: 8, 16>}, {transform_indices = @transform_5, window_bounds = array<i64: 8, 1152>}]} {
    %c0 = arith.constant 0 : index
    %c0_0 = arith.constant 0 : index
    %0 = vector.load %arg2[%c0, %c0_0] : memref<16x72xbf16, #tpu.memory_space<vmem>>, vector<16x72xbf16>
    %c0_1 = arith.constant 0 : index
    %c0_2 = arith.constant 0 : index
    %1 = vector.load %arg1[%c0_1, %c0_2] : memref<72x1152xbf16, #tpu.memory_space<vmem>>, vector<72x1152xbf16>
    %cst = arith.constant dense<0.000000e+00> : vector<16x1152xf32>
    %2 = tpu.matmul %0, %1, %cst {dimension_numbers = #tpu.dot_dimension_numbers<[1], [0], [0], [1], [0, 0, 1, 1], [], []>} : vector<16x72xbf16>, vector<72x1152xbf16>, vector<16x1152xf32> -> vector<16x1152xf32>
    %cst_3 = arith.constant 0.000000e+00 : f32
    %3 = vector.broadcast %cst_3 : f32 to vector<16x1152xf32>
    %4 = arith.maximumf %2, %3 : vector<16x1152xf32>
    %c0_4 = arith.constant 0 : index
    %c0_5 = arith.constant 0 : index
    %5 = vector.load %arg3[%c0_4, %c0_5] : memref<16x1xf32, #tpu.memory_space<vmem>>, vector<16x1xf32>
    %6 = vector.broadcast %5 : vector<16x1xf32> to vector<16x1152xf32>
    %7 = arith.mulf %4, %6 : vector<16x1152xf32>
    %c0_6 = arith.constant 0 : index
    %c0_7 = arith.constant 0 : index
    %8 = vector.load %arg4[%c0_6, %c0_7] : memref<16x1xf32, #tpu.memory_space<vmem>>, vector<16x1xf32>
    %9 = vector.broadcast %8 : vector<16x1xf32> to vector<16x1152xf32>
    %10 = arith.addf %7, %9 : vector<16x1152xf32>
    %c0_8 = arith.constant 0 : index
    %c0_9 = arith.constant 0 : index
    %11 = vector.load %arg5[%c0_8, %c0_9] : memref<8x16xbf16, #tpu.memory_space<vmem>>, vector<8x16xbf16>
    %12 = arith.truncf %10 : vector<16x1152xf32> to vector<16x1152xbf16>
    %cst_10 = arith.constant dense<0.000000e+00> : vector<8x1152xf32>
    %13 = tpu.matmul %11, %12, %cst_10 {dimension_numbers = #tpu.dot_dimension_numbers<[1], [0], [0], [1], [0, 0, 1, 1], [], []>} : vector<8x16xbf16>, vector<16x1152xbf16>, vector<8x1152xf32> -> vector<8x1152xf32>
    %c0_11 = arith.constant 0 : index
    %c0_12 = arith.constant 0 : index
    %14 = vector.load %arg6[%c0_11, %c0_12] : memref<8x1152xf32, #tpu.memory_space<vmem>>, vector<8x1152xf32>
    tpu.vector_store %arg6[%c0_11, %c0_12], %13 {strides = array<i32>} : memref<8x1152xf32, #tpu.memory_space<vmem>>, vector<8x1152xf32>,
    return
  }
  func.func @transform_0(%arg0: i32) -> (i32, i32) {
    %c0_i32 = arith.constant 0 : i32
    %c0_i32_0 = arith.constant 0 : i32
    return %c0_i32, %arg0 : i32, i32
  }
  func.func @transform_1(%arg0: i32) -> (i32, i32) {
    %c0_i32 = arith.constant 0 : i32
    %c0_i32_0 = arith.constant 0 : i32
    %c0_i32_1 = arith.constant 0 : i32
    return %c0_i32, %c0_i32_0 : i32, i32
  }
  func.func @transform_2(%arg0: i32) -> (i32, i32) {
    %c0_i32 = arith.constant 0 : i32
    %c0_i32_0 = arith.constant 0 : i32
    %c0_i32_1 = arith.constant 0 : i32
    return %c0_i32, %c0_i32_0 : i32, i32
  }
  func.func @transform_3(%arg0: i32) -> (i32, i32) {
    %c0_i32 = arith.constant 0 : i32
    %c0_i32_0 = arith.constant 0 : i32
    %c0_i32_1 = arith.constant 0 : i32
    return %c0_i32, %c0_i32_0 : i32, i32
  }
  func.func @transform_4(%arg0: i32) -> (i32, i32) {
    %c0_i32 = arith.constant 0 : i32
    %c0_i32_0 = arith.constant 0 : i32
    %c0_i32_1 = arith.constant 0 : i32
    return %c0_i32, %c0_i32_0 : i32, i32
  }
  func.func @transform_5(%arg0: i32) -> (i32, i32) {
    %c0_i32 = arith.constant 0 : i32
    %c0_i32_0 = arith.constant 0 : i32
    return %c0_i32, %arg0 : i32, i32
  }
}

module attributes {stable_mosaic.version = 11 : i64} {
  func.func @_conv_kernel(%arg0: i32, %arg1: memref<72x256xbf16, #tpu.memory_space<vmem>>, %arg2: memref<16x72xbf16, #tpu.memory_space<vmem>>, %arg3: memref<16x1xf32, #tpu.memory_space<vmem>>, %arg4: memref<16x1xf32, #tpu.memory_space<vmem>>, %arg5: memref<16x256xf32, #tpu.memory_space<vmem>>) attributes {dimension_semantics = [#tpu.dimension_semantics<parallel>], iteration_bounds = array<i64: 1>, scalar_prefetch = 0 : i64, scratch_operands = 0 : i64, tpu.core_type = #tpu.core_type<tc>, window_params = [{transform_indices = @transform_0, window_bounds = array<i64: 72, 256>}, {pipeline_mode = #tpu.pipeline_mode<synchronous>, transform_indices = @transform_1, window_bounds = array<i64: 16, 72>}, {pipeline_mode = #tpu.pipeline_mode<synchronous>, transform_indices = @transform_2, window_bounds = array<i64: 16, 1>}, {pipeline_mode = #tpu.pipeline_mode<synchronous>, transform_indices = @transform_3, window_bounds = array<i64: 16, 1>}, {transform_indices = @transform_4, window_bounds = array<i64: 16, 256>}]} {
    %c0 = arith.constant 0 : index
    %c0_0 = arith.constant 0 : index
    %0 = vector.load %arg2[%c0, %c0_0] : memref<16x72xbf16, #tpu.memory_space<vmem>>, vector<16x72xbf16>
    %c0_1 = arith.constant 0 : index
    %c0_2 = arith.constant 0 : index
    %1 = vector.load %arg1[%c0_1, %c0_2] : memref<72x256xbf16, #tpu.memory_space<vmem>>, vector<72x256xbf16>
    %cst = arith.constant dense<0.000000e+00> : vector<16x256xf32>
    %2 = tpu.matmul %0, %1, %cst {dimension_numbers = #tpu.dot_dimension_numbers<[1], [0], [0], [1], [0, 0, 1, 1], [], []>} : vector<16x72xbf16>, vector<72x256xbf16>, vector<16x256xf32> -> vector<16x256xf32>
    %cst_3 = arith.constant 0.000000e+00 : f32
    %3 = vector.broadcast %cst_3 : f32 to vector<16x256xf32>
    %4 = arith.maximumf %2, %3 : vector<16x256xf32>
    %c0_4 = arith.constant 0 : index
    %c0_5 = arith.constant 0 : index
    %5 = vector.load %arg3[%c0_4, %c0_5] : memref<16x1xf32, #tpu.memory_space<vmem>>, vector<16x1xf32>
    %6 = vector.broadcast %5 : vector<16x1xf32> to vector<16x256xf32>
    %7 = arith.mulf %4, %6 : vector<16x256xf32>
    %c0_6 = arith.constant 0 : index
    %c0_7 = arith.constant 0 : index
    %8 = vector.load %arg4[%c0_6, %c0_7] : memref<16x1xf32, #tpu.memory_space<vmem>>, vector<16x1xf32>
    %9 = vector.broadcast %8 : vector<16x1xf32> to vector<16x256xf32>
    %10 = arith.addf %7, %9 : vector<16x256xf32>
    %c0_8 = arith.constant 0 : index
    %c0_9 = arith.constant 0 : index
    %11 = vector.load %arg5[%c0_8, %c0_9] : memref<16x256xf32, #tpu.memory_space<vmem>>, vector<16x256xf32>
    tpu.vector_store %arg5[%c0_8, %c0_9], %10 {strides = array<i32>} : memref<16x256xf32, #tpu.memory_space<vmem>>, vector<16x256xf32>,
    return
  }
  func.func @transform_0(%arg0: i32) -> (i32, i32) {
    %c0_i32 = arith.constant 0 : i32
    %c0_i32_0 = arith.constant 0 : i32
    return %c0_i32, %arg0 : i32, i32
  }
  func.func @transform_1(%arg0: i32) -> (i32, i32) {
    %c0_i32 = arith.constant 0 : i32
    %c0_i32_0 = arith.constant 0 : i32
    %c0_i32_1 = arith.constant 0 : i32
    return %c0_i32, %c0_i32_0 : i32, i32
  }
  func.func @transform_2(%arg0: i32) -> (i32, i32) {
    %c0_i32 = arith.constant 0 : i32
    %c0_i32_0 = arith.constant 0 : i32
    %c0_i32_1 = arith.constant 0 : i32
    return %c0_i32, %c0_i32_0 : i32, i32
  }
  func.func @transform_3(%arg0: i32) -> (i32, i32) {
    %c0_i32 = arith.constant 0 : i32
    %c0_i32_0 = arith.constant 0 : i32
    %c0_i32_1 = arith.constant 0 : i32
    return %c0_i32, %c0_i32_0 : i32, i32
  }
  func.func @transform_4(%arg0: i32) -> (i32, i32) {
    %c0_i32 = arith.constant 0 : i32
    %c0_i32_0 = arith.constant 0 : i32
    return %c0_i32, %arg0 : i32, i32
  }
}

module attributes {stable_mosaic.version = 11 : i64} {
  func.func @_conv_kernel(%arg0: i32, %arg1: memref<144x128xbf16, #tpu.memory_space<vmem>>, %arg2: memref<8x144xbf16, #tpu.memory_space<vmem>>, %arg3: memref<8x1xf32, #tpu.memory_space<vmem>>, %arg4: memref<8x1xf32, #tpu.memory_space<vmem>>, %arg5: memref<8x128xf32, #tpu.memory_space<vmem>>) attributes {dimension_semantics = [#tpu.dimension_semantics<parallel>], iteration_bounds = array<i64: 1>, scalar_prefetch = 0 : i64, scratch_operands = 0 : i64, tpu.core_type = #tpu.core_type<tc>, window_params = [{transform_indices = @transform_0, window_bounds = array<i64: 144, 128>}, {pipeline_mode = #tpu.pipeline_mode<synchronous>, transform_indices = @transform_1, window_bounds = array<i64: 8, 144>}, {pipeline_mode = #tpu.pipeline_mode<synchronous>, transform_indices = @transform_2, window_bounds = array<i64: 8, 1>}, {pipeline_mode = #tpu.pipeline_mode<synchronous>, transform_indices = @transform_3, window_bounds = array<i64: 8, 1>}, {transform_indices = @transform_4, window_bounds = array<i64: 8, 128>}]} {
    %c0 = arith.constant 0 : index
    %c0_0 = arith.constant 0 : index
    %0 = vector.load %arg2[%c0, %c0_0] : memref<8x144xbf16, #tpu.memory_space<vmem>>, vector<8x144xbf16>
    %c0_1 = arith.constant 0 : index
    %c0_2 = arith.constant 0 : index
    %1 = vector.load %arg1[%c0_1, %c0_2] : memref<144x128xbf16, #tpu.memory_space<vmem>>, vector<144x128xbf16>
    %cst = arith.constant dense<0.000000e+00> : vector<8x128xf32>
    %2 = tpu.matmul %0, %1, %cst {dimension_numbers = #tpu.dot_dimension_numbers<[1], [0], [0], [1], [0, 0, 1, 1], [], []>} : vector<8x144xbf16>, vector<144x128xbf16>, vector<8x128xf32> -> vector<8x128xf32>
    %cst_3 = arith.constant 0.000000e+00 : f32
    %3 = vector.broadcast %cst_3 : f32 to vector<8x128xf32>
    %4 = arith.maximumf %2, %3 : vector<8x128xf32>
    %c0_4 = arith.constant 0 : index
    %c0_5 = arith.constant 0 : index
    %5 = vector.load %arg3[%c0_4, %c0_5] : memref<8x1xf32, #tpu.memory_space<vmem>>, vector<8x1xf32>
    %6 = vector.broadcast %5 : vector<8x1xf32> to vector<8x128xf32>
    %7 = arith.mulf %4, %6 : vector<8x128xf32>
    %c0_6 = arith.constant 0 : index
    %c0_7 = arith.constant 0 : index
    %8 = vector.load %arg4[%c0_6, %c0_7] : memref<8x1xf32, #tpu.memory_space<vmem>>, vector<8x1xf32>
    %9 = vector.broadcast %8 : vector<8x1xf32> to vector<8x128xf32>
    %10 = arith.addf %7, %9 : vector<8x128xf32>
    %c0_8 = arith.constant 0 : index
    %c0_9 = arith.constant 0 : index
    %11 = vector.load %arg5[%c0_8, %c0_9] : memref<8x128xf32, #tpu.memory_space<vmem>>, vector<8x128xf32>
    tpu.vector_store %arg5[%c0_8, %c0_9], %10 {strides = array<i32>} : memref<8x128xf32, #tpu.memory_space<vmem>>, vector<8x128xf32>,
    return
  }
  func.func @transform_0(%arg0: i32) -> (i32, i32) {
    %c0_i32 = arith.constant 0 : i32
    %c0_i32_0 = arith.constant 0 : i32
    return %c0_i32, %arg0 : i32, i32
  }
  func.func @transform_1(%arg0: i32) -> (i32, i32) {
    %c0_i32 = arith.constant 0 : i32
    %c0_i32_0 = arith.constant 0 : i32
    %c0_i32_1 = arith.constant 0 : i32
    return %c0_i32, %c0_i32_0 : i32, i32
  }
  func.func @transform_2(%arg0: i32) -> (i32, i32) {
    %c0_i32 = arith.constant 0 : i32
    %c0_i32_0 = arith.constant 0 : i32
    %c0_i32_1 = arith.constant 0 : i32
    return %c0_i32, %c0_i32_0 : i32, i32
  }
  func.func @transform_3(%arg0: i32) -> (i32, i32) {
    %c0_i32 = arith.constant 0 : i32
    %c0_i32_0 = arith.constant 0 : i32
    %c0_i32_1 = arith.constant 0 : i32
    return %c0_i32, %c0_i32_0 : i32, i32
  }
  func.func @transform_4(%arg0: i32) -> (i32, i32) {
    %c0_i32 = arith.constant 0 : i32
    %c0_i32_0 = arith.constant 0 : i32
    return %c0_i32, %arg0 : i32, i32
  }
}

module attributes {stable_mosaic.version = 11 : i64} {
  func.func @_conv_kernel(%arg0: i32, %arg1: memref<72x128xbf16, #tpu.memory_space<vmem>>, %arg2: memref<16x72xbf16, #tpu.memory_space<vmem>>, %arg3: memref<16x1xf32, #tpu.memory_space<vmem>>, %arg4: memref<16x1xf32, #tpu.memory_space<vmem>>, %arg5: memref<16x128xf32, #tpu.memory_space<vmem>>) attributes {dimension_semantics = [#tpu.dimension_semantics<parallel>], iteration_bounds = array<i64: 1>, scalar_prefetch = 0 : i64, scratch_operands = 0 : i64, tpu.core_type = #tpu.core_type<tc>, window_params = [{transform_indices = @transform_0, window_bounds = array<i64: 72, 128>}, {pipeline_mode = #tpu.pipeline_mode<synchronous>, transform_indices = @transform_1, window_bounds = array<i64: 16, 72>}, {pipeline_mode = #tpu.pipeline_mode<synchronous>, transform_indices = @transform_2, window_bounds = array<i64: 16, 1>}, {pipeline_mode = #tpu.pipeline_mode<synchronous>, transform_indices = @transform_3, window_bounds = array<i64: 16, 1>}, {transform_indices = @transform_4, window_bounds = array<i64: 16, 128>}]} {
    %c0 = arith.constant 0 : index
    %c0_0 = arith.constant 0 : index
    %0 = vector.load %arg2[%c0, %c0_0] : memref<16x72xbf16, #tpu.memory_space<vmem>>, vector<16x72xbf16>
    %c0_1 = arith.constant 0 : index
    %c0_2 = arith.constant 0 : index
    %1 = vector.load %arg1[%c0_1, %c0_2] : memref<72x128xbf16, #tpu.memory_space<vmem>>, vector<72x128xbf16>
    %cst = arith.constant dense<0.000000e+00> : vector<16x128xf32>
    %2 = tpu.matmul %0, %1, %cst {dimension_numbers = #tpu.dot_dimension_numbers<[1], [0], [0], [1], [0, 0, 1, 1], [], []>} : vector<16x72xbf16>, vector<72x128xbf16>, vector<16x128xf32> -> vector<16x128xf32>
    %cst_3 = arith.constant 0.000000e+00 : f32
    %3 = vector.broadcast %cst_3 : f32 to vector<16x128xf32>
    %4 = arith.maximumf %2, %3 : vector<16x128xf32>
    %c0_4 = arith.constant 0 : index
    %c0_5 = arith.constant 0 : index
    %5 = vector.load %arg3[%c0_4, %c0_5] : memref<16x1xf32, #tpu.memory_space<vmem>>, vector<16x1xf32>
    %6 = vector.broadcast %5 : vector<16x1xf32> to vector<16x128xf32>
    %7 = arith.mulf %4, %6 : vector<16x128xf32>
    %c0_6 = arith.constant 0 : index
    %c0_7 = arith.constant 0 : index
    %8 = vector.load %arg4[%c0_6, %c0_7] : memref<16x1xf32, #tpu.memory_space<vmem>>, vector<16x1xf32>
    %9 = vector.broadcast %8 : vector<16x1xf32> to vector<16x128xf32>
    %10 = arith.addf %7, %9 : vector<16x128xf32>
    %c0_8 = arith.constant 0 : index
    %c0_9 = arith.constant 0 : index
    %11 = vector.load %arg5[%c0_8, %c0_9] : memref<16x128xf32, #tpu.memory_space<vmem>>, vector<16x128xf32>
    tpu.vector_store %arg5[%c0_8, %c0_9], %10 {strides = array<i32>} : memref<16x128xf32, #tpu.memory_space<vmem>>, vector<16x128xf32>,
    return
  }
  func.func @transform_0(%arg0: i32) -> (i32, i32) {
    %c0_i32 = arith.constant 0 : i32
    %c0_i32_0 = arith.constant 0 : i32
    return %c0_i32, %arg0 : i32, i32
  }
  func.func @transform_1(%arg0: i32) -> (i32, i32) {
    %c0_i32 = arith.constant 0 : i32
    %c0_i32_0 = arith.constant 0 : i32
    %c0_i32_1 = arith.constant 0 : i32
    return %c0_i32, %c0_i32_0 : i32, i32
  }
  func.func @transform_2(%arg0: i32) -> (i32, i32) {
    %c0_i32 = arith.constant 0 : i32
    %c0_i32_0 = arith.constant 0 : i32
    %c0_i32_1 = arith.constant 0 : i32
    return %c0_i32, %c0_i32_0 : i32, i32
  }
  func.func @transform_3(%arg0: i32) -> (i32, i32) {
    %c0_i32 = arith.constant 0 : i32
    %c0_i32_0 = arith.constant 0 : i32
    %c0_i32_1 = arith.constant 0 : i32
    return %c0_i32, %c0_i32_0 : i32, i32
  }
  func.func @transform_4(%arg0: i32) -> (i32, i32) {
    %c0_i32 = arith.constant 0 : i32
    %c0_i32_0 = arith.constant 0 : i32
    return %c0_i32, %arg0 : i32, i32
  }
}

module attributes {stable_mosaic.version = 11 : i64} {
  func.func @_conv_kernel(%arg0: i32, %arg1: memref<144x128xbf16, #tpu.memory_space<vmem>>, %arg2: memref<16x144xbf16, #tpu.memory_space<vmem>>, %arg3: memref<16x1xf32, #tpu.memory_space<vmem>>, %arg4: memref<16x1xf32, #tpu.memory_space<vmem>>, %arg5: memref<16x128xf32, #tpu.memory_space<vmem>>) attributes {dimension_semantics = [#tpu.dimension_semantics<parallel>], iteration_bounds = array<i64: 1>, scalar_prefetch = 0 : i64, scratch_operands = 0 : i64, tpu.core_type = #tpu.core_type<tc>, window_params = [{transform_indices = @transform_0, window_bounds = array<i64: 144, 128>}, {pipeline_mode = #tpu.pipeline_mode<synchronous>, transform_indices = @transform_1, window_bounds = array<i64: 16, 144>}, {pipeline_mode = #tpu.pipeline_mode<synchronous>, transform_indices = @transform_2, window_bounds = array<i64: 16, 1>}, {pipeline_mode = #tpu.pipeline_mode<synchronous>, transform_indices = @transform_3, window_bounds = array<i64: 16, 1>}, {transform_indices = @transform_4, window_bounds = array<i64: 16, 128>}]} {
    %c0 = arith.constant 0 : index
    %c0_0 = arith.constant 0 : index
    %0 = vector.load %arg2[%c0, %c0_0] : memref<16x144xbf16, #tpu.memory_space<vmem>>, vector<16x144xbf16>
    %c0_1 = arith.constant 0 : index
    %c0_2 = arith.constant 0 : index
    %1 = vector.load %arg1[%c0_1, %c0_2] : memref<144x128xbf16, #tpu.memory_space<vmem>>, vector<144x128xbf16>
    %cst = arith.constant dense<0.000000e+00> : vector<16x128xf32>
    %2 = tpu.matmul %0, %1, %cst {dimension_numbers = #tpu.dot_dimension_numbers<[1], [0], [0], [1], [0, 0, 1, 1], [], []>} : vector<16x144xbf16>, vector<144x128xbf16>, vector<16x128xf32> -> vector<16x128xf32>
    %cst_3 = arith.constant 0.000000e+00 : f32
    %3 = vector.broadcast %cst_3 : f32 to vector<16x128xf32>
    %4 = arith.maximumf %2, %3 : vector<16x128xf32>
    %c0_4 = arith.constant 0 : index
    %c0_5 = arith.constant 0 : index
    %5 = vector.load %arg3[%c0_4, %c0_5] : memref<16x1xf32, #tpu.memory_space<vmem>>, vector<16x1xf32>
    %6 = vector.broadcast %5 : vector<16x1xf32> to vector<16x128xf32>
    %7 = arith.mulf %4, %6 : vector<16x128xf32>
    %c0_6 = arith.constant 0 : index
    %c0_7 = arith.constant 0 : index
    %8 = vector.load %arg4[%c0_6, %c0_7] : memref<16x1xf32, #tpu.memory_space<vmem>>, vector<16x1xf32>
    %9 = vector.broadcast %8 : vector<16x1xf32> to vector<16x128xf32>
    %10 = arith.addf %7, %9 : vector<16x128xf32>
    %c0_8 = arith.constant 0 : index
    %c0_9 = arith.constant 0 : index
    %11 = vector.load %arg5[%c0_8, %c0_9] : memref<16x128xf32, #tpu.memory_space<vmem>>, vector<16x128xf32>
    tpu.vector_store %arg5[%c0_8, %c0_9], %10 {strides = array<i32>} : memref<16x128xf32, #tpu.memory_space<vmem>>, vector<16x128xf32>,
    return
  }
  func.func @transform_0(%arg0: i32) -> (i32, i32) {
    %c0_i32 = arith.constant 0 : i32
    %c0_i32_0 = arith.constant 0 : i32
    return %c0_i32, %arg0 : i32, i32
  }
  func.func @transform_1(%arg0: i32) -> (i32, i32) {
    %c0_i32 = arith.constant 0 : i32
    %c0_i32_0 = arith.constant 0 : i32
    %c0_i32_1 = arith.constant 0 : i32
    return %c0_i32, %c0_i32_0 : i32, i32
  }
  func.func @transform_2(%arg0: i32) -> (i32, i32) {
    %c0_i32 = arith.constant 0 : i32
    %c0_i32_0 = arith.constant 0 : i32
    %c0_i32_1 = arith.constant 0 : i32
    return %c0_i32, %c0_i32_0 : i32, i32
  }
  func.func @transform_3(%arg0: i32) -> (i32, i32) {
    %c0_i32 = arith.constant 0 : i32
    %c0_i32_0 = arith.constant 0 : i32
    %c0_i32_1 = arith.constant 0 : i32
    return %c0_i32, %c0_i32_0 : i32, i32
  }
  func.func @transform_4(%arg0: i32) -> (i32, i32) {
    %c0_i32 = arith.constant 0 : i32
    %c0_i32_0 = arith.constant 0 : i32
    return %c0_i32, %arg0 : i32, i32
  }
}

module attributes {stable_mosaic.version = 11 : i64} {
  func.func @_head_kernel(%arg0: i32, %arg1: memref<16x2xf32, #tpu.memory_space<vmem>>, %arg2: memref<10x16xf32, #tpu.memory_space<vmem>>, %arg3: memref<10x2xf32, #tpu.memory_space<vmem>>) attributes {dimension_semantics = [#tpu.dimension_semantics<arbitrary>], iteration_bounds = array<i64: 1>, scalar_prefetch = 0 : i64, scratch_operands = 0 : i64, tpu.core_type = #tpu.core_type<tc>, window_params = [{pipeline_mode = #tpu.pipeline_mode<synchronous>, transform_indices = @transform_0, window_bounds = array<i64: 16, 2>}, {pipeline_mode = #tpu.pipeline_mode<synchronous>, transform_indices = @transform_1, window_bounds = array<i64: 10, 16>}, {pipeline_mode = #tpu.pipeline_mode<synchronous>, transform_indices = @transform_2, window_bounds = array<i64: 10, 2>}]} {
    %c0 = arith.constant 0 : index
    %c0_0 = arith.constant 0 : index
    %0 = vector.load %arg2[%c0, %c0_0] : memref<10x16xf32, #tpu.memory_space<vmem>>, vector<10x16xf32>
    %c0_1 = arith.constant 0 : index
    %c0_2 = arith.constant 0 : index
    %1 = vector.load %arg1[%c0_1, %c0_2] : memref<16x2xf32, #tpu.memory_space<vmem>>, vector<16x2xf32>
    %cst = arith.constant dense<0.000000e+00> : vector<10x2xf32>
    %2 = tpu.matmul %0, %1, %cst {dimension_numbers = #tpu.dot_dimension_numbers<[1], [0], [0], [1], [0, 0, 1, 1], [], []>} : vector<10x16xf32>, vector<16x2xf32>, vector<10x2xf32> -> vector<10x2xf32>
    %cst_3 = arith.constant dense<0xFF800000> : vector<2xf32>
    %3 = vector.multi_reduction <maximumf>, %2, %cst_3 [0] : vector<10x2xf32> to vector<2xf32>
    %4 = vector.shape_cast %3 : vector<2xf32> to vector<1x2xf32>
    %5 = vector.broadcast %4 : vector<1x2xf32> to vector<10x2xf32>
    %6 = arith.subf %2, %5 : vector<10x2xf32>
    %7 = math.exp %6 : vector<10x2xf32>
    %cst_4 = arith.constant dense<0.000000e+00> : vector<2xf32>
    %8 = vector.multi_reduction <add>, %7, %cst_4 [0] : vector<10x2xf32> to vector<2xf32>
    %9 = vector.shape_cast %8 : vector<2xf32> to vector<1x2xf32>
    %10 = math.log %9 : vector<1x2xf32>
    %11 = vector.broadcast %10 : vector<1x2xf32> to vector<10x2xf32>
    %12 = arith.subf %6, %11 : vector<10x2xf32>
    %c0_5 = arith.constant 0 : index
    %c0_6 = arith.constant 0 : index
    %13 = vector.load %arg3[%c0_5, %c0_6] : memref<10x2xf32, #tpu.memory_space<vmem>>, vector<10x2xf32>
    tpu.vector_store %arg3[%c0_5, %c0_6], %12 {strides = array<i32>} : memref<10x2xf32, #tpu.memory_space<vmem>>, vector<10x2xf32>,
    return
  }
  func.func @transform_0(%arg0: i32) -> (i32, i32) {
    %c0_i32 = arith.constant 0 : i32
    %c0_i32_0 = arith.constant 0 : i32
    %c0_i32_1 = arith.constant 0 : i32
    return %c0_i32, %c0_i32_0 : i32, i32
  }
  func.func @transform_1(%arg0: i32) -> (i32, i32) {
    %c0_i32 = arith.constant 0 : i32
    %c0_i32_0 = arith.constant 0 : i32
    %c0_i32_1 = arith.constant 0 : i32
    return %c0_i32, %c0_i32_0 : i32, i32
  }
  func.func @transform_2(%arg0: i32) -> (i32, i32) {
    %c0_i32 = arith.constant 0 : i32
    %c0_i32_0 = arith.constant 0 : i32
    %c0_i32_1 = arith.constant 0 : i32
    return %c0_i32, %c0_i32_0 : i32, i32
  }
}

</mosaic_0001>

<llo_original>
// kernel: _lambda_.7
$region0: #{_lambda_.7}
  #allocation0 [shape = 'u32[]', space=smem, size = 0x4, offset = 0x4, fixed_abs, tag = 'smem constant byte address 0x4 - core index']
  #allocation1 [shape = 'u32[144,128]{1,0:T(1,128)}', space=vmem, size = 0x12000, scoped, tag = 'internal scratch']
  %s0 = inlined_call_operand.vmem [shape: bf16[9,1408], index: 0, kind: input, shape index: {}]
  %s1 = inlined_call_operand.vmem [shape: bf16[8,9], index: 1, kind: input, shape index: {}]
  %s2 = inlined_call_operand.vmem [shape: f32[8,1], index: 2, kind: input, shape index: {}]
  %s3 = inlined_call_operand.vmem [shape: f32[8,1], index: 3, kind: input, shape index: {}]
  %s4 = inlined_call_operand.vmem [shape: f32[8,1408], index: 4, kind: output, shape index: {}]
  %s5 = sld [smem:[#allocation0]]
  $region26: #{_lambda_.7} parent=0
    _
  %s7 = ssub.s32 1, %s5
  %s8 = scalar_select 0, %s7, %s5
  // Predicated region
  $region2: #{_lambda_.7} parent=0 // pred_check
    _
  $region3: #{_lambda_.7} parent=0 // pred_check_branch
    %10 = sbr.rel (0) target = $region5
  $region4: #{_lambda_.7} parent=0 // pred_region
    _
  $region5: #{_lambda_.7} parent=0 // pred_fallthru
    _
  // Predicated region
  $region6: #{_lambda_.7} parent=0 // pred_check
    _
  $region7: #{_lambda_.7} parent=0 // pred_check_branch
    %12 = sbr.rel (0) target = $region9
  $region8: #{_lambda_.7} parent=0 // pred_region
    _
  $region9: #{_lambda_.7} parent=0 // pred_fallthru
    _
  // Predicated region
  $region10: #{_lambda_.7} parent=0 // pred_check
    _
  $region11: #{_lambda_.7} parent=0 // pred_check_branch
    %14 = sbr.rel (0) target = $region13
  $region12: #{_lambda_.7} parent=0 // pred_region
    _
  $region13: #{_lambda_.7} parent=0 // pred_fallthru
    _
  // Predicated region
  $region14: #{_lambda_.7} parent=0 // pred_check
    _
  $region15: #{_lambda_.7} parent=0 // pred_check_branch
    %16 = sbr.rel (0) target = $region17
  $region16: #{_lambda_.7} parent=0 // pred_region
    _
  $region17: #{_lambda_.7} parent=0 // pred_fallthru
    _
  %v18 = vld [vmem:[%s1] sm:$0xf]
  %v19 = vld [vmem:[%s0] sm:$0xff]
  %v20 = vld [vmem:[%s0 + $0x8] sm:$0xff]
  %v21 = vld [vmem:[%s0 + $0x10] sm:$0xff]
  %v22 = vld [vmem:[%s0 + $0x18] sm:$0xff]
  %v23 = vld [vmem:[%s0 + $0x20] sm:$0xff]
  %v24 = vld [vmem:[%s0 + $0x28] sm:$0xf]
  %v25 = vld [vmem:[%s0 + $0x2c] sm:$0x11]
  %v26 = vld [vmem:[%s0 + $0x34] sm:$0x11]
  %v27 = vld [vmem:[%s0 + $0x3c] sm:$0x11]
  %v28 = vld [vmem:[%s0 + $0x44] sm:$0x11]
  %v29 = vld [vmem:[%s0 + $0x4c] sm:$0x11]
  %v30 = vld [vmem:[%s0 + $0x54] sm:$0x1]
  %v43 = vunpack.c.l.b16 %v19
  %v44 = vunpack.c.h.b16 %v19
  %v45 = vunpack.c.l.b16 %v20
  %v46 = vunpack.c.h.b16 %v20
  %v47 = vunpack.c.l.b16 %v21
  %v48 = vunpack.c.h.b16 %v21
  %v49 = vunpack.c.l.b16 %v22
  %v50 = vunpack.c.h.b16 %v22
  %v51 = vunpack.c.l.b16 %v23
  %v52 = vunpack.c.h.b16 %v23
  %v53 = vunpack.c.l.b16 %v24
  %v54 = vunpack.c.l.b16 %v25
  %v55 = vunpack.c.h.b16 %v25
  %v56 = vunpack.c.l.b16 %v26
  %v57 = vunpack.c.h.b16 %v26
  %v58 = vunpack.c.l.b16 %v27
  %v59 = vunpack.c.h.b16 %v27
  %v60 = vunpack.c.l.b16 %v28
  %v61 = vunpack.c.h.b16 %v28
  %v62 = vunpack.c.l.b16 %v29
  %v63 = vunpack.c.h.b16 %v29
  %v64 = vunpack.c.l.b16 %v30
  %v65 = vpack.c.b16 %v54, %v43
  %v66 = vpack.c.b16 %v55, %v44
  %v67 = vpack.c.b16 %v56, %v45
  %v68 = vpack.c.b16 %v57, %v46
  %v69 = vpack.c.b16 %v58, %v47
  %v70 = vpack.c.b16 %v59, %v48
  %v71 = vpack.c.b16 %v60, %v49
  %v72 = vpack.c.b16 %v61, %v50
  %v73 = vpack.c.b16 %v62, %v51
  %v74 = vpack.c.b16 %v63, %v52
  %v75 = vpack.c.b16 %v64, %v53
  %vm76 = vcmask 72704
  %v78 = vsel %vm76, %v18, 0
  %vm80 = vcmask 1043456
  %vm81 = vcmask 1044480
  %v82 = vsel %vm80, 4294967295, 65535
  %v83 = vsel %vm81, %v82, 0
  %v85 = vand.u32 %v65, %v83
  %v88 = vand.u32 %v66, %v83
  %v91 = vand.u32 %v67, %v83
  %v94 = vand.u32 %v68, %v83
  %v97 = vand.u32 %v69, %v83
  %v100 = vand.u32 %v70, %v83
  %v103 = vand.u32 %v71, %v83
  %v106 = vand.u32 %v72, %v83
  %v109 = vand.u32 %v73, %v83
  %v112 = vand.u32 %v74, %v83
  %v115 = vand.u32 %v75, %v83
  %117 = vmatprep.subr.bf16.mxu0 %v88
  %118 = vmatpush1.bf16.msra.mxu0 %v85
  %119 = vmatprep.subr.bf16.mxu0 0
  %120 = vmatpush1.bf16.msra.mxu0 0
  %121 = vmatprep.subr.bf16.mxu0 0
  %122 = vmatpush1.bf16.msra.mxu0 0
  %123 = vmatprep.subr.bf16.mxu0 0
  %124 = vmatpush1.bf16.msra.mxu0 0
  %125 = vmatprep.subr.bf16.mxu0 0
  %126 = vmatpush1.bf16.msra.mxu0 0
  %127 = vmatprep.subr.bf16.mxu0 0
  %128 = vmatpush1.bf16.msra.mxu0 0
  %129 = vmatprep.subr.bf16.mxu0 0
  %130 = vmatpush1.bf16.msra.mxu0 0
  %131 = vmatprep.subr.bf16.mxu0 0
  %132 = vmatpush1.bf16.msra.mxu0 0
  %133 = vmatprep.subr.bf16.mxu0 0
  %134 = vmatpush1.bf16.msra.mxu0 0
  %135 = vmatprep.subr.bf16.mxu0 0
  %136 = vmatpush1.bf16.msra.mxu0 0
  %137 = vmatprep.subr.bf16.mxu0 0
  %138 = vmatpush1.bf16.msra.mxu0 0
  %139 = vmatprep.subr.bf16.mxu0 0
  %140 = vmatpush1.bf16.msra.mxu0 0
  %141 = vmatprep.subr.bf16.mxu0 0
  %142 = vmatpush1.bf16.msra.mxu0 0
  %143 = vmatprep.subr.bf16.mxu0 0
  %144 = vmatpush1.bf16.msra.mxu0 0
  %145 = vmatprep.subr.bf16.mxu0 0
  %146 = vmatpush1.bf16.msra.mxu0 0
  %147 = vmatprep.subr.bf16.mxu0 0
  %148 = vmatpush1.bf16.msra.mxu0 0
  %149 = vmatprep.mubr.bf16.mxu0 0
  %150 = vmatmul.mubr.bf16.gmra.mrb[0].mxu0 %v78
  %v151 = vpop.f32.mrb[0].mxu0
  %v152 = vadd.f32 0.0, %v151
  %v153 = vpop.f32.mrb[0].mxu0
  %v154 = vadd.f32 0.0, %v153
  %v155 = vpop.f32.mrb[0].mxu0
  %v156 = vpop.f32.mrb[0].mxu0
  %157 = vdwg.mxu0
  %158 = vmatprep.subr.bf16.mxu0 %v94
  %159 = vmatpush1.bf16.msra.mxu0 %v91
  %160 = vmatprep.subr.bf16.mxu0 0
  %161 = vmatpush1.bf16.msra.mxu0 0
  %162 = vmatprep.subr.bf16.mxu0 0
  %163 = vmatpush1.bf16.msra.mxu0 0
  %164 = vmatprep.subr.bf16.mxu0 0
  %165 = vmatpush1.bf16.msra.mxu0 0
  %166 = vmatprep.subr.bf16.mxu0 0
  %167 = vmatpush1.bf16.msra.mxu0 0
  %168 = vmatprep.subr.bf16.mxu0 0
  %169 = vmatpush1.bf16.msra.mxu0 0
  %170 = vmatprep.subr.bf16.mxu0 0
  %171 = vmatpush1.bf16.msra.mxu0 0
  %172 = vmatprep.subr.bf16.mxu0 0
  %173 = vmatpush1.bf16.msra.mxu0 0
  %174 = vmatprep.subr.bf16.mxu0 0
  %175 = vmatpush1.bf16.msra.mxu0 0
  %176 = vmatprep.subr.bf16.mxu0 0
  %177 = vmatpush1.bf16.msra.mxu0 0
  %178 = vmatprep.subr.bf16.mxu0 0
  %179 = vmatpush1.bf16.msra.mxu0 0
  %180 = vmatprep.subr.bf16.mxu0 0
  %181 = vmatpush1.bf16.msra.mxu0 0
  %182 = vmatprep.subr.bf16.mxu0 0
  %183 = vmatpush1.bf16.msra.mxu0 0
  %184 = vmatprep.subr.bf16.mxu0 0
  %185 = vmatpush1.bf16.msra.mxu0 0
  %186 = vmatprep.subr.bf16.mxu0 0
  %187 = vmatpush1.bf16.msra.mxu0 0
  %188 = vmatprep.subr.bf16.mxu0 0
  %189 = vmatpush1.bf16.msra.mxu0 0
  %190 = vmatprep.mubr.bf16.mxu0 0
  %191 = vmatmul.mubr.bf16.gmra.mrb[0].mxu0 %v78
  %v192 = vpop.f32.mrb[0].mxu0
  %v193 = vadd.f32 0.0, %v192
  %v194 = vpop.f32.mrb[0].mxu0
  %v195 = vadd.f32 0.0, %v194
  %v196 = vpop.f32.mrb[0].mxu0
  %v197 = vpop.f32.mrb[0].mxu0
  %198 = vdwg.mxu0
  %199 = vmatprep.subr.bf16.mxu0 %v100
  %200 = vmatpush1.bf16.msra.mxu0 %v97
  %201 = vmatprep.subr.bf16.mxu0 0
  %202 = vmatpush1.bf16.msra.mxu0 0
  %203 = vmatprep.subr.bf16.mxu0 0
  %204 = vmatpush1.bf16.msra.mxu0 0
  %205 = vmatprep.subr.bf16.mxu0 0
  %206 = vmatpush1.bf16.msra.mxu0 0
  %207 = vmatprep.subr.bf16.mxu0 0
  %208 = vmatpush1.bf16.msra.mxu0 0
  %209 = vmatprep.subr.bf16.mxu0 0
  %210 = vmatpush1.bf16.msra.mxu0 0
  %211 = vmatprep.subr.bf16.mxu0 0
  %212 = vmatpush1.bf16.msra.mxu0 0
  %213 = vmatprep.subr.bf16.mxu0 0
  %214 = vmatpush1.bf16.msra.mxu0 0
  %215 = vmatprep.subr.bf16.mxu0 0
  %216 = vmatpush1.bf16.msra.mxu0 0
  %217 = vmatprep.subr.bf16.mxu0 0
  %218 = vmatpush1.bf16.msra.mxu0 0
  %219 = vmatprep.subr.bf16.mxu0 0
  %220 = vmatpush1.bf16.msra.mxu0 0
  %221 = vmatprep.subr.bf16.mxu0 0
  %222 = vmatpush1.bf16.msra.mxu0 0
  %223 = vmatprep.subr.bf16.mxu0 0
  %224 = vmatpush1.bf16.msra.mxu0 0
  %225 = vmatprep.subr.bf16.mxu0 0
  %226 = vmatpush1.bf16.msra.mxu0 0
  %227 = vmatprep.subr.bf16.mxu0 0
  %228 = vmatpush1.bf16.msra.mxu0 0
  %229 = vmatprep.subr.bf16.mxu0 0
  %230 = vmatpush1.bf16.msra.mxu0 0
  %231 = vmatprep.mubr.bf16.mxu0 0
  %232 = vmatmul.mubr.bf16.gmra.mrb[0].mxu0 %v78
  %v233 = vpop.f32.mrb[0].mxu0
  %v234 = vadd.f32 0.0, %v233
  %v235 = vpop.f32.mrb[0].mxu0
  %v236 = vadd.f32 0.0, %v235
  %v237 = vpop.f32.mrb[0].mxu0
  %v238 = vpop.f32.mrb[0].mxu0
  %239 = vdwg.mxu0
  %240 = vmatprep.subr.bf16.mxu0 %v106
  %241 = vmatpush1.bf16.msra.mxu0 %v103
  %242 = vmatprep.subr.bf16.mxu0 0
  %243 = vmatpush1.bf16.msra.mxu0 0
  %244 = vmatprep.subr.bf16.mxu0 0
  %245 = vmatpush1.bf16.msra.mxu0 0
  %246 = vmatprep.subr.bf16.mxu0 0
  %247 = vmatpush1.bf16.msra.mxu0 0
  %248 = vmatprep.subr.bf16.mxu0 0
  %249 = vmatpush1.bf16.msra.mxu0 0
  %250 = vmatprep.subr.bf16.mxu0 0
  %251 = vmatpush1.bf16.msra.mxu0 0
  %252 = vmatprep.subr.bf16.mxu0 0
  %253 = vmatpush1.bf16.msra.mxu0 0
  %254 = vmatprep.subr.bf16.mxu0 0
  %255 = vmatpush1.bf16.msra.mxu0 0
  %256 = vmatprep.subr.bf16.mxu0 0
  %257 = vmatpush1.bf16.msra.mxu0 0
  %258 = vmatprep.subr.bf16.mxu0 0
  %259 = vmatpush1.bf16.msra.mxu0 0
  %260 = vmatprep.subr.bf16.mxu0 0
  %261 = vmatpush1.bf16.msra.mxu0 0
  %262 = vmatprep.subr.bf16.mxu0 0
  %263 = vmatpush1.bf16.msra.mxu0 0
  %264 = vmatprep.subr.bf16.mxu0 0
  %265 = vmatpush1.bf16.msra.mxu0 0
  %266 = vmatprep.subr.bf16.mxu0 0
  %267 = vmatpush1.bf16.msra.mxu0 0
  %268 = vmatprep.subr.bf16.mxu0 0
  %269 = vmatpush1.bf16.msra.mxu0 0
  %270 = vmatprep.subr.bf16.mxu0 0
  %271 = vmatpush1.bf16.msra.mxu0 0
  %272 = vmatprep.mubr.bf16.mxu0 0
  %273 = vmatmul.mubr.bf16.gmra.mrb[0].mxu0 %v78
  %v274 = vpop.f32.mrb[0].mxu0
  %v275 = vadd.f32 0.0, %v274
  %v276 = vpop.f32.mrb[0].mxu0
  %v277 = vadd.f32 0.0, %v276
  %v278 = vpop.f32.mrb[0].mxu0
  %v279 = vpop.f32.mrb[0].mxu0
  %280 = vdwg.mxu0
  %281 = vmatprep.subr.bf16.mxu0 %v112
  %282 = vmatpush1.bf16.msra.mxu0 %v109
  %283 = vmatprep.subr.bf16.mxu0 0
  %284 = vmatpush1.bf16.msra.mxu0 0
  %285 = vmatprep.subr.bf16.mxu0 0
  %286 = vmatpush1.bf16.msra.mxu0 0
  %287 = vmatprep.subr.bf16.mxu0 0
  %288 = vmatpush1.bf16.msra.mxu0 0
  %289 = vmatprep.subr.bf16.mxu0 0
  %290 = vmatpush1.bf16.msra.mxu0 0
  %291 = vmatprep.subr.bf16.mxu0 0
  %292 = vmatpush1.bf16.msra.mxu0 0
  %293 = vmatprep.subr.bf16.mxu0 0
  %294 = vmatpush1.bf16.msra.mxu0 0
  %295 = vmatprep.subr.bf16.mxu0 0
  %296 = vmatpush1.bf16.msra.mxu0 0
  %297 = vmatprep.subr.bf16.mxu0 0
  %298 = vmatpush1.bf16.msra.mxu0 0
  %299 = vmatprep.subr.bf16.mxu0 0
  %300 = vmatpush1.bf16.msra.mxu0 0
  %301 = vmatprep.subr.bf16.mxu0 0
  %302 = vmatpush1.bf16.msra.mxu0 0
  %303 = vmatprep.subr.bf16.mxu0 0
  %304 = vmatpush1.bf16.msra.mxu0 0
  %305 = vmatprep.subr.bf16.mxu0 0
  %306 = vmatpush1.bf16.msra.mxu0 0
  %307 = vmatprep.subr.bf16.mxu0 0
  %308 = vmatpush1.bf16.msra.mxu0 0
  %309 = vmatprep.subr.bf16.mxu0 0
  %310 = vmatpush1.bf16.msra.mxu0 0
  %311 = vmatprep.subr.bf16.mxu0 0
  %312 = vmatpush1.bf16.msra.mxu0 0
  %313 = vmatprep.mubr.bf16.mxu0 0
  %314 = vmatmul.mubr.bf16.gmra.mrb[0].mxu0 %v78
  %v315 = vpop.f32.mrb[0].mxu0
  %v316 = vadd.f32 0.0, %v315
  %v317 = vpop.f32.mrb[0].mxu0
  %v318 = vadd.f32 0.0, %v317
  %v319 = vpop.f32.mrb[0].mxu0
  %v320 = vpop.f32.mrb[0].mxu0
  %321 = vdwg.mxu0
  %322 = vmatprep.subr.bf16.mxu0 0
  %323 = vmatpush1.bf16.msra.mxu0 %v115
  %324 = vmatprep.subr.bf16.mxu0 0
  %325 = vmatpush1.bf16.msra.mxu0 0
  %326 = vmatprep.subr.bf16.mxu0 0
  %327 = vmatpush1.bf16.msra.mxu0 0
  %328 = vmatprep.subr.bf16.mxu0 0
  %329 = vmatpush1.bf16.msra.mxu0 0
  %330 = vmatprep.subr.bf16.mxu0 0
  %331 = vmatpush1.bf16.msra.mxu0 0
  %332 = vmatprep.subr.bf16.mxu0 0
  %333 = vmatpush1.bf16.msra.mxu0 0
  %334 = vmatprep.subr.bf16.mxu0 0
  %335 = vmatpush1.bf16.msra.mxu0 0
  %336 = vmatprep.subr.bf16.mxu0 0
  %337 = vmatpush1.bf16.msra.mxu0 0
  %338 = vmatprep.subr.bf16.mxu0 0
  %339 = vmatpush1.bf16.msra.mxu0 0
  %340 = vmatprep.subr.bf16.mxu0 0
  %341 = vmatpush1.bf16.msra.mxu0 0
  %342 = vmatprep.subr.bf16.mxu0 0
  %343 = vmatpush1.bf16.msra.mxu0 0
  %344 = vmatprep.subr.bf16.mxu0 0
  %345 = vmatpush1.bf16.msra.mxu0 0
  %346 = vmatprep.subr.bf16.mxu0 0
  %347 = vmatpush1.bf16.msra.mxu0 0
  %348 = vmatprep.subr.bf16.mxu0 0
  %349 = vmatpush1.bf16.msra.mxu0 0
  %350 = vmatprep.subr.bf16.mxu0 0
  %351 = vmatpush1.bf16.msra.mxu0 0
  %352 = vmatprep.subr.bf16.mxu0 0
  %353 = vmatpush1.bf16.msra.mxu0 0
  %354 = vmatprep.mubr.bf16.mxu0 0
  %355 = vmatmul.mubr.bf16.gmra.mrb[0].mxu0 %v78
  %v356 = vpop.f32.mrb[0].mxu0
  %v357 = vadd.f32 0.0, %v356
  %v358 = vpop.f32.mrb[0].mxu0
  %v359 = vpop.f32.mrb[0].mxu0
  %v360 = vpop.f32.mrb[0].mxu0
  %361 = vdwg.mxu0
  %v362 = vmax.f32 %v152, 0.0
  %v363 = vmax.f32 %v154, 0.0
  %v364 = vmax.f32 %v193, 0.0
  %v365 = vmax.f32 %v195, 0.0
  %v366 = vmax.f32 %v234, 0.0
  %v367 = vmax.f32 %v236, 0.0
  %v368 = vmax.f32 %v275, 0.0
  %v369 = vmax.f32 %v277, 0.0
  %v370 = vmax.f32 %v316, 0.0
  %v371 = vmax.f32 %v318, 0.0
  %v372 = vmax.f32 %v357, 0.0
  %v373 = vld [vmem:[%s2] sm:$0xff]
  %375 = vset.pattern.permute.xlu0 0
  %376 = vperm.xlu0 %375, %v373
  %v377 = vpop.permute.xlu0 %376
  %v379 = vmul.f32 %v362, %v377
  %v380 = vmul.f32 %v363, %v377
  %v381 = vmul.f32 %v364, %v377
  %v382 = vmul.f32 %v365, %v377
  %v383 = vmul.f32 %v366, %v377
  %v384 = vmul.f32 %v367, %v377
  %v385 = vmul.f32 %v368, %v377
  %v386 = vmul.f32 %v369, %v377
  %v387 = vmul.f32 %v370, %v377
  %v388 = vmul.f32 %v371, %v377
  %v389 = vmul.f32 %v372, %v377
  %v390 = vld [vmem:[%s3] sm:$0xff]
  %392 = vset.pattern.permute.xlu0 0
  %393 = vperm.xlu0 %392, %v390
  %v394 = vpop.permute.xlu0 %393
  %v396 = vadd.f32 %v379, %v394
  %v397 = vadd.f32 %v380, %v394
  %v398 = vadd.f32 %v381, %v394
  %v399 = vadd.f32 %v382, %v394
  %v400 = vadd.f32 %v383, %v394
  %v401 = vadd.f32 %v384, %v394
  %v402 = vadd.f32 %v385, %v394
  %v403 = vadd.f32 %v386, %v394
  %v404 = vadd.f32 %v387, %v394
  %v405 = vadd.f32 %v388, %v394
  %v406 = vadd.f32 %v389, %v394
  %407 = vst [vmem:[%s4] sm:$0xff] %v396
  %408 = vst [vmem:[%s4 + $0x8] sm:$0xff] %v397
  %409 = vst [vmem:[%s4 + $0x10] sm:$0xff] %v398
  %410 = vst [vmem:[%s4 + $0x18] sm:$0xff] %v399
  %411 = vst [vmem:[%s4 + $0x20] sm:$0xff] %v400
  %412 = vst [vmem:[%s4 + $0x28] sm:$0xff] %v401
  %413 = vst [vmem:[%s4 + $0x30] sm:$0xff] %v402
  %414 = vst [vmem:[%s4 + $0x38] sm:$0xff] %v403
  %415 = vst [vmem:[%s4 + $0x40] sm:$0xff] %v404
  %416 = vst [vmem:[%s4 + $0x48] sm:$0xff] %v405
  %417 = vst [vmem:[%s4 + $0x50] sm:$0xff] %v406
  // Predicated region
  $region18: #{_lambda_.7} parent=0 // pred_check
    _
  $region19: #{_lambda_.7} parent=0 // pred_check_branch
    %419 = sbr.rel (0) target = $region21
  $region20: #{_lambda_.7} parent=0 // pred_region
    _
  $region21: #{_lambda_.7} parent=0 // pred_fallthru
    _
  // Predicated region
  $region22: #{_lambda_.7} parent=0 // pred_check
    _
  $region23: #{_lambda_.7} parent=0 // pred_check_branch
    %421 = sbr.rel (0) target = $region25
  $region24: #{_lambda_.7} parent=0 // pred_region
    _
  $region25: #{_lambda_.7} parent=0 // pred_fallthru
    _

// kernel: _lambda_.8
$region0: #{_lambda_.8}
  #allocation0 [shape = 'u32[]', space=smem, size = 0x4, offset = 0x4, fixed_abs, tag = 'smem constant byte address 0x4 - core index']
  #allocation1 [shape = 'u32[144,128]{1,0:T(1,128)}', space=vmem, size = 0x12000, scoped, tag = 'internal scratch']
  %s0 = inlined_call_operand.vmem [shape: bf16[72,1152], index: 0, kind: input, shape index: {}]
  %s1 = inlined_call_operand.vmem [shape: bf16[16,72], index: 1, kind: input, shape index: {}]
  %s2 = inlined_call_operand.vmem [shape: f32[16,1], index: 2, kind: input, shape index: {}]
  %s3 = inlined_call_operand.vmem [shape: f32[16,1], index: 3, kind: input, shape index: {}]
  %s4 = inlined_call_operand.vmem [shape: bf16[8,16], index: 4, kind: input, shape index: {}]
  %s5 = inlined_call_operand.vmem [shape: f32[8,1152], index: 5, kind: output, shape index: {}]
  %s6 = sld [smem:[#allocation0]]
  $region30: #{_lambda_.8} parent=0
    _
  %s8 = ssub.s32 1, %s6
  %s9 = scalar_select 0, %s8, %s6
  // Predicated region
  $region2: #{_lambda_.8} parent=0 // pred_check
    _
  $region3: #{_lambda_.8} parent=0 // pred_check_branch
    %11 = sbr.rel (0) target = $region5
  $region4: #{_lambda_.8} parent=0 // pred_region
    _
  $region5: #{_lambda_.8} parent=0 // pred_fallthru
    _
  // Predicated region
  $region6: #{_lambda_.8} parent=0 // pred_check
    _
  $region7: #{_lambda_.8} parent=0 // pred_check_branch
    %13 = sbr.rel (0) target = $region9
  $region8: #{_lambda_.8} parent=0 // pred_region
    _
  $region9: #{_lambda_.8} parent=0 // pred_fallthru
    _
  // Predicated region
  $region10: #{_lambda_.8} parent=0 // pred_check
    _
  $region11: #{_lambda_.8} parent=0 // pred_check_branch
    %15 = sbr.rel (0) target = $region13
  $region12: #{_lambda_.8} parent=0 // pred_region
    _
  $region13: #{_lambda_.8} parent=0 // pred_fallthru
    _
  // Predicated region
  $region14: #{_lambda_.8} parent=0 // pred_check
    _
  $region15: #{_lambda_.8} parent=0 // pred_check_branch
    %17 = sbr.rel (0) target = $region17
  $region16: #{_lambda_.8} parent=0 // pred_region
    _
  $region17: #{_lambda_.8} parent=0 // pred_fallthru
    _
  // Predicated region
  $region18: #{_lambda_.8} parent=0 // pred_check
    _
  $region19: #{_lambda_.8} parent=0 // pred_check_branch
    %19 = sbr.rel (0) target = $region21
  $region20: #{_lambda_.8} parent=0 // pred_region
    _
  $region21: #{_lambda_.8} parent=0 // pred_fallthru
    _
  %v21 = vld [vmem:[%s1] sm:$0xf]
  %v22 = vld [vmem:[%s1 + $0x4] sm:$0xf]
  %v23 = vld [vmem:[%s0] sm:$0xff]
  %v24 = vld [vmem:[%s0 + $0x8] sm:$0xff]
  %v25 = vld [vmem:[%s0 + $0x10] sm:$0xff]
  %v26 = vld [vmem:[%s0 + $0x18] sm:$0xff]
  %v27 = vld [vmem:[%s0 + $0x20] sm:$0xf]
  %v28 = vld [vmem:[%s0 + $0x24] sm:$0xff]
  %v29 = vld [vmem:[%s0 + $0x2c] sm:$0xff]
  %v30 = vld [vmem:[%s0 + $0x34] sm:$0xff]
  %v31 = vld [vmem:[%s0 + $0x3c] sm:$0xff]
  %v32 = vld [vmem:[%s0 + $0x44] sm:$0xf]
  %v33 = vld [vmem:[%s0 + $0x48] sm:$0xff]
  %v34 = vld [vmem:[%s0 + $0x50] sm:$0xff]
  %v35 = vld [vmem:[%s0 + $0x58] sm:$0xff]
  %v36 = vld [vmem:[%s0 + $0x60] sm:$0xff]
  %v37 = vld [vmem:[%s0 + $0x68] sm:$0xf]
  %v38 = vld [vmem:[%s0 + $0x6c] sm:$0xff]
  %v39 = vld [vmem:[%s0 + $0x74] sm:$0xff]
  %v40 = vld [vmem:[%s0 + $0x7c] sm:$0xff]
  %v41 = vld [vmem:[%s0 + $0x84] sm:$0xff]
  %v42 = vld [vmem:[%s0 + $0x8c] sm:$0xf]
  %v43 = vld [vmem:[%s0 + $0x90] sm:$0xff]
  %v44 = vld [vmem:[%s0 + $0x98] sm:$0xff]
  %v45 = vld [vmem:[%s0 + $0xa0] sm:$0xff]
  %v46 = vld [vmem:[%s0 + $0xa8] sm:$0xff]
  %v47 = vld [vmem:[%s0 + $0xb0] sm:$0xf]
  %v48 = vld [vmem:[%s0 + $0xb4] sm:$0xff]
  %v49 = vld [vmem:[%s0 + $0xbc] sm:$0xff]
  %v50 = vld [vmem:[%s0 + $0xc4] sm:$0xff]
  %v51 = vld [vmem:[%s0 + $0xcc] sm:$0xff]
  %v52 = vld [vmem:[%s0 + $0xd4] sm:$0xf]
  %v53 = vld [vmem:[%s0 + $0xd8] sm:$0xff]
  %v54 = vld [vmem:[%s0 + $0xe0] sm:$0xff]
  %v55 = vld [vmem:[%s0 + $0xe8] sm:$0xff]
  %v56 = vld [vmem:[%s0 + $0xf0] sm:$0xff]
  %v57 = vld [vmem:[%s0 + $0xf8] sm:$0xf]
  %v58 = vld [vmem:[%s0 + $0xfc] sm:$0xff]
  %v59 = vld [vmem:[%s0 + $0x104] sm:$0xff]
  %v60 = vld [vmem:[%s0 + $0x10c] sm:$0xff]
  %v61 = vld [vmem:[%s0 + $0x114] sm:$0xff]
  %v62 = vld [vmem:[%s0 + $0x11c] sm:$0xf]
  %v63 = vld [vmem:[%s0 + $0x120] sm:$0xff]
  %v64 = vld [vmem:[%s0 + $0x128] sm:$0xff]
  %v65 = vld [vmem:[%s0 + $0x130] sm:$0xff]
  %v66 = vld [vmem:[%s0 + $0x138] sm:$0xff]
  %v67 = vld [vmem:[%s0 + $0x140] sm:$0xf]
  %v70 = vunpack.c.l.b16 %v21
  %v71 = vunpack.c.l.b16 %v22
  %v72 = vpack.c.b16 %v71, %v70
  %v118 = vunpack.c.l.b16 %v23
  %v119 = vunpack.c.h.b16 %v23
  %v120 = vunpack.c.l.b16 %v24
  %v121 = vunpack.c.h.b16 %v24
  %v122 = vunpack.c.l.b16 %v25
  %v123 = vunpack.c.h.b16 %v25
  %v124 = vunpack.c.l.b16 %v26
  %v125 = vunpack.c.h.b16 %v26
  %v126 = vunpack.c.l.b16 %v27
  %v127 = vunpack.c.l.b16 %v28
  %v128 = vunpack.c.h.b16 %v28
  %v129 = vunpack.c.l.b16 %v29
  %v130 = vunpack.c.h.b16 %v29
  %v131 = vunpack.c.l.b16 %v30
  %v132 = vunpack.c.h.b16 %v30
  %v133 = vunpack.c.l.b16 %v31
  %v134 = vunpack.c.h.b16 %v31
  %v135 = vunpack.c.l.b16 %v32
  %v136 = vunpack.c.l.b16 %v33
  %v137 = vunpack.c.h.b16 %v33
  %v138 = vunpack.c.l.b16 %v34
  %v139 = vunpack.c.h.b16 %v34
  %v140 = vunpack.c.l.b16 %v35
  %v141 = vunpack.c.h.b16 %v35
  %v142 = vunpack.c.l.b16 %v36
  %v143 = vunpack.c.h.b16 %v36
  %v144 = vunpack.c.l.b16 %v37
  %v145 = vunpack.c.l.b16 %v38
  %v146 = vunpack.c.h.b16 %v38
  %v147 = vunpack.c.l.b16 %v39
  %v148 = vunpack.c.h.b16 %v39
  %v149 = vunpack.c.l.b16 %v40
  %v150 = vunpack.c.h.b16 %v40
  %v151 = vunpack.c.l.b16 %v41
  %v152 = vunpack.c.h.b16 %v41
  %v153 = vunpack.c.l.b16 %v42
  %v154 = vunpack.c.l.b16 %v43
  %v155 = vunpack.c.h.b16 %v43
  %v156 = vunpack.c.l.b16 %v44
  %v157 = vunpack.c.h.b16 %v44
  %v158 = vunpack.c.l.b16 %v45
  %v159 = vunpack.c.h.b16 %v45
  %v160 = vunpack.c.l.b16 %v46
  %v161 = vunpack.c.h.b16 %v46
  %v162 = vunpack.c.l.b16 %v47
  %v163 = vunpack.c.l.b16 %v48
  %v164 = vunpack.c.h.b16 %v48
  %v165 = vunpack.c.l.b16 %v49
  %v166 = vunpack.c.h.b16 %v49
  %v167 = vunpack.c.l.b16 %v50
  %v168 = vunpack.c.h.b16 %v50
  %v169 = vunpack.c.l.b16 %v51
  %v170 = vunpack.c.h.b16 %v51
  %v171 = vunpack.c.l.b16 %v52
  %v172 = vunpack.c.l.b16 %v53
  %v173 = vunpack.c.h.b16 %v53
  %v174 = vunpack.c.l.b16 %v54
  %v175 = vunpack.c.h.b16 %v54
  %v176 = vunpack.c.l.b16 %v55
  %v177 = vunpack.c.h.b16 %v55
  %v178 = vunpack.c.l.b16 %v56
  %v179 = vunpack.c.h.b16 %v56
  %v180 = vunpack.c.l.b16 %v57
  %v181 = vunpack.c.l.b16 %v58
  %v182 = vunpack.c.h.b16 %v58
  %v183 = vunpack.c.l.b16 %v59
  %v184 = vunpack.c.h.b16 %v59
  %v185 = vunpack.c.l.b16 %v60
  %v186 = vunpack.c.h.b16 %v60
  %v187 = vunpack.c.l.b16 %v61
  %v188 = vunpack.c.h.b16 %v61
  %v189 = vunpack.c.l.b16 %v62
  %v190 = vunpack.c.l.b16 %v63
  %v191 = vunpack.c.h.b16 %v63
  %v192 = vunpack.c.l.b16 %v64
  %v193 = vunpack.c.h.b16 %v64
  %v194 = vunpack.c.l.b16 %v65
  %v195 = vunpack.c.h.b16 %v65
  %v196 = vunpack.c.l.b16 %v66
  %v197 = vunpack.c.h.b16 %v66
  %v198 = vunpack.c.l.b16 %v67
  %v199 = vpack.c.b16 %v127, %v118
  %v200 = vpack.c.b16 %v128, %v119
  %v201 = vpack.c.b16 %v129, %v120
  %v202 = vpack.c.b16 %v130, %v121
  %v203 = vpack.c.b16 %v131, %v122
  %v204 = vpack.c.b16 %v132, %v123
  %v205 = vpack.c.b16 %v133, %v124
  %v206 = vpack.c.b16 %v134, %v125
  %v207 = vpack.c.b16 %v135, %v126
  %v208 = vpack.c.b16 %v145, %v136
  %v209 = vpack.c.b16 %v146, %v137
  %v210 = vpack.c.b16 %v147, %v138
  %v211 = vpack.c.b16 %v148, %v139
  %v212 = vpack.c.b16 %v149, %v140
  %v213 = vpack.c.b16 %v150, %v141
  %v214 = vpack.c.b16 %v151, %v142
  %v215 = vpack.c.b16 %v152, %v143
  %v216 = vpack.c.b16 %v153, %v144
  %v217 = vpack.c.b16 %v163, %v154
  %v218 = vpack.c.b16 %v164, %v155
  %v219 = vpack.c.b16 %v165, %v156
  %v220 = vpack.c.b16 %v166, %v157
  %v221 = vpack.c.b16 %v167, %v158
  %v222 = vpack.c.b16 %v168, %v159
  %v223 = vpack.c.b16 %v169, %v160
  %v224 = vpack.c.b16 %v170, %v161
  %v225 = vpack.c.b16 %v171, %v162
  %v226 = vpack.c.b16 %v181, %v172
  %v227 = vpack.c.b16 %v182, %v173
  %v228 = vpack.c.b16 %v183, %v174
  %v229 = vpack.c.b16 %v184, %v175
  %v230 = vpack.c.b16 %v185, %v176
  %v231 = vpack.c.b16 %v186, %v177
  %v232 = vpack.c.b16 %v187, %v178
  %v233 = vpack.c.b16 %v188, %v179
  %v234 = vpack.c.b16 %v189, %v180
  %v235 = vpack.c.b16 %v190, %v190
  %v236 = vpack.c.b16 %v191, %v191
  %v237 = vpack.c.b16 %v192, %v192
  %v238 = vpack.c.b16 %v193, %v193
  %v239 = vpack.c.b16 %v194, %v194
  %v240 = vpack.c.b16 %v195, %v195
  %v241 = vpack.c.b16 %v196, %v196
  %v242 = vpack.c.b16 %v197, %v197
  %v243 = vpack.c.b16 %v198, %v198
  %vm280 = vcmask 588800
  %v282 = vsel %vm280, %v72, 0
  %vm284 = vcmask 1043456
  %v286 = vsel %vm284, %v235, 0
  %v289 = vsel %vm284, %v236, 0
  %v292 = vsel %vm284, %v237, 0
  %v295 = vsel %vm284, %v238, 0
  %v298 = vsel %vm284, %v239, 0
  %v301 = vsel %vm284, %v240, 0
  %v304 = vsel %vm284, %v241, 0
  %v307 = vsel %vm284, %v242, 0
  %v310 = vsel %vm284, %v243, 0
  %312 = vmatprep.subr.bf16.mxu0 %v200
  %313 = vmatpush1.bf16.msra.mxu0 %v199
  %314 = vmatprep.subr.bf16.mxu0 %v209
  %315 = vmatpush1.bf16.msra.mxu0 %v208
  %316 = vmatprep.subr.bf16.mxu0 %v218
  %317 = vmatpush1.bf16.msra.mxu0 %v217
  %318 = vmatprep.subr.bf16.mxu0 %v227
  %319 = vmatpush1.bf16.msra.mxu0 %v226
  %320 = vmatprep.subr.bf16.mxu0 %v289
  %321 = vmatpush1.bf16.msra.mxu0 %v286
  %322 = vmatprep.subr.bf16.mxu0 0
  %323 = vmatpush1.bf16.msra.mxu0 0
  %324 = vmatprep.subr.bf16.mxu0 0
  %325 = vmatpush1.bf16.msra.mxu0 0
  %326 = vmatprep.subr.bf16.mxu0 0
  %327 = vmatpush1.bf16.msra.mxu0 0
  %328 = vmatprep.subr.bf16.mxu0 0
  %329 = vmatpush1.bf16.msra.mxu0 0
  %330 = vmatprep.subr.bf16.mxu0 0
  %331 = vmatpush1.bf16.msra.mxu0 0
  %332 = vmatprep.subr.bf16.mxu0 0
  %333 = vmatpush1.bf16.msra.mxu0 0
  %334 = vmatprep.subr.bf16.mxu0 0
  %335 = vmatpush1.bf16.msra.mxu0 0
  %336 = vmatprep.subr.bf16.mxu0 0
  %337 = vmatpush1.bf16.msra.mxu0 0
  %338 = vmatprep.subr.bf16.mxu0 0
  %339 = vmatpush1.bf16.msra.mxu0 0
  %340 = vmatprep.subr.bf16.mxu0 0
  %341 = vmatpush1.bf16.msra.mxu0 0
  %342 = vmatprep.subr.bf16.mxu0 0
  %343 = vmatpush1.bf16.msra.mxu0 0
  %344 = vmatprep.mubr.bf16.mxu0 0
  %345 = vmatmul.mubr.bf16.gmra.mrb[0].mxu0 %v282
  %v346 = vpop.f32.mrb[0].mxu0
  %v347 = vadd.f32 0.0, %v346
  %v348 = vpop.f32.mrb[0].mxu0
  %v349 = vadd.f32 0.0, %v348
  %v350 = vpop.f32.mrb[0].mxu0
  %v351 = vadd.f32 0.0, %v350
  %v352 = vpop.f32.mrb[0].mxu0
  %v353 = vadd.f32 0.0, %v352
  %354 = vdwg.mxu0
  %355 = vmatprep.subr.bf16.mxu0 %v202
  %356 = vmatpush1.bf16.msra.mxu0 %v201
  %357 = vmatprep.subr.bf16.mxu0 %v211
  %358 = vmatpush1.bf16.msra.mxu0 %v210
  %359 = vmatprep.subr.bf16.mxu0 %v220
  %360 = vmatpush1.bf16.msra.mxu0 %v219
  %361 = vmatprep.subr.bf16.mxu0 %v229
  %362 = vmatpush1.bf16.msra.mxu0 %v228
  %363 = vmatprep.subr.bf16.mxu0 %v295
  %364 = vmatpush1.bf16.msra.mxu0 %v292
  %365 = vmatprep.subr.bf16.mxu0 0
  %366 = vmatpush1.bf16.msra.mxu0 0
  %367 = vmatprep.subr.bf16.mxu0 0
  %368 = vmatpush1.bf16.msra.mxu0 0
  %369 = vmatprep.subr.bf16.mxu0 0
  %370 = vmatpush1.bf16.msra.mxu0 0
  %371 = vmatprep.subr.bf16.mxu0 0
  %372 = vmatpush1.bf16.msra.mxu0 0
  %373 = vmatprep.subr.bf16.mxu0 0
  %374 = vmatpush1.bf16.msra.mxu0 0
  %375 = vmatprep.subr.bf16.mxu0 0
  %376 = vmatpush1.bf16.msra.mxu0 0
  %377 = vmatprep.subr.bf16.mxu0 0
  %378 = vmatpush1.bf16.msra.mxu0 0
  %379 = vmatprep.subr.bf16.mxu0 0
  %380 = vmatpush1.bf16.msra.mxu0 0
  %381 = vmatprep.subr.bf16.mxu0 0
  %382 = vmatpush1.bf16.msra.mxu0 0
  %383 = vmatprep.subr.bf16.mxu0 0
  %384 = vmatpush1.bf16.msra.mxu0 0
  %385 = vmatprep.subr.bf16.mxu0 0
  %386 = vmatpush1.bf16.msra.mxu0 0
  %387 = vmatprep.mubr.bf16.mxu0 0
  %388 = vmatmul.mubr.bf16.gmra.mrb[0].mxu0 %v282
  %v389 = vpop.f32.mrb[0].mxu0
  %v390 = vadd.f32 0.0, %v389
  %v391 = vpop.f32.mrb[0].mxu0
  %v392 = vadd.f32 0.0, %v391
  %v393 = vpop.f32.mrb[0].mxu0
  %v394 = vadd.f32 0.0, %v393
  %v395 = vpop.f32.mrb[0].mxu0
  %v396 = vadd.f32 0.0, %v395
  %397 = vdwg.mxu0
  %398 = vmatprep.subr.bf16.mxu0 %v204
  %399 = vmatpush1.bf16.msra.mxu0 %v203
  %400 = vmatprep.subr.bf16.mxu0 %v213
  %401 = vmatpush1.bf16.msra.mxu0 %v212
  %402 = vmatprep.subr.bf16.mxu0 %v222
  %403 = vmatpush1.bf16.msra.mxu0 %v221
  %404 = vmatprep.subr.bf16.mxu0 %v231
  %405 = vmatpush1.bf16.msra.mxu0 %v230
  %406 = vmatprep.subr.bf16.mxu0 %v301
  %407 = vmatpush1.bf16.msra.mxu0 %v298
  %408 = vmatprep.subr.bf16.mxu0 0
  %409 = vmatpush1.bf16.msra.mxu0 0
  %410 = vmatprep.subr.bf16.mxu0 0
  %411 = vmatpush1.bf16.msra.mxu0 0
  %412 = vmatprep.subr.bf16.mxu0 0
  %413 = vmatpush1.bf16.msra.mxu0 0
  %414 = vmatprep.subr.bf16.mxu0 0
  %415 = vmatpush1.bf16.msra.mxu0 0
  %416 = vmatprep.subr.bf16.mxu0 0
  %417 = vmatpush1.bf16.msra.mxu0 0
  %418 = vmatprep.subr.bf16.mxu0 0
  %419 = vmatpush1.bf16.msra.mxu0 0
  %420 = vmatprep.subr.bf16.mxu0 0
  %421 = vmatpush1.bf16.msra.mxu0 0
  %422 = vmatprep.subr.bf16.mxu0 0
  %423 = vmatpush1.bf16.msra.mxu0 0
  %424 = vmatprep.subr.bf16.mxu0 0
  %425 = vmatpush1.bf16.msra.mxu0 0
  %426 = vmatprep.subr.bf16.mxu0 0
  %427 = vmatpush1.bf16.msra.mxu0 0
  %428 = vmatprep.subr.bf16.mxu0 0
  %429 = vmatpush1.bf16.msra.mxu0 0
  %430 = vmatprep.mubr.bf16.mxu0 0
  %431 = vmatmul.mubr.bf16.gmra.mrb[0].mxu0 %v282
  %v432 = vpop.f32.mrb[0].mxu0
  %v433 = vadd.f32 0.0, %v432
  %v434 = vpop.f32.mrb[0].mxu0
  %v435 = vadd.f32 0.0, %v434
  %v436 = vpop.f32.mrb[0].mxu0
  %v437 = vadd.f32 0.0, %v436
  %v438 = vpop.f32.mrb[0].mxu0
  %v439 = vadd.f32 0.0, %v438
  %440 = vdwg.mxu0
  %441 = vmatprep.subr.bf16.mxu0 %v206
  %442 = vmatpush1.bf16.msra.mxu0 %v205
  %443 = vmatprep.subr.bf16.mxu0 %v215
  %444 = vmatpush1.bf16.msra.mxu0 %v214
  %445 = vmatprep.subr.bf16.mxu0 %v224
  %446 = vmatpush1.bf16.msra.mxu0 %v223
  %447 = vmatprep.subr.bf16.mxu0 %v233
  %448 = vmatpush1.bf16.msra.mxu0 %v232
  %449 = vmatprep.subr.bf16.mxu0 %v307
  %450 = vmatpush1.bf16.msra.mxu0 %v304
  %451 = vmatprep.subr.bf16.mxu0 0
  %452 = vmatpush1.bf16.msra.mxu0 0
  %453 = vmatprep.subr.bf16.mxu0 0
  %454 = vmatpush1.bf16.msra.mxu0 0
  %455 = vmatprep.subr.bf16.mxu0 0
  %456 = vmatpush1.bf16.msra.mxu0 0
  %457 = vmatprep.subr.bf16.mxu0 0
  %458 = vmatpush1.bf16.msra.mxu0 0
  %459 = vmatprep.subr.bf16.mxu0 0
  %460 = vmatpush1.bf16.msra.mxu0 0
  %461 = vmatprep.subr.bf16.mxu0 0
  %462 = vmatpush1.bf16.msra.mxu0 0
  %463 = vmatprep.subr.bf16.mxu0 0
  %464 = vmatpush1.bf16.msra.mxu0 0
  %465 = vmatprep.subr.bf16.mxu0 0
  %466 = vmatpush1.bf16.msra.mxu0 0
  %467 = vmatprep.subr.bf16.mxu0 0
  %468 = vmatpush1.bf16.msra.mxu0 0
  %469 = vmatprep.subr.bf16.mxu0 0
  %470 = vmatpush1.bf16.msra.mxu0 0
  %471 = vmatprep.subr.bf16.mxu0 0
  %472 = vmatpush1.bf16.msra.mxu0 0
  %473 = vmatprep.mubr.bf16.mxu0 0
  %474 = vmatmul.mubr.bf16.gmra.mrb[0].mxu0 %v282
  %v475 = vpop.f32.mrb[0].mxu0
  %v476 = vadd.f32 0.0, %v475
  %v477 = vpop.f32.mrb[0].mxu0
  %v478 = vadd.f32 0.0, %v477
  %v479 = vpop.f32.mrb[0].mxu0
  %v480 = vadd.f32 0.0, %v479
  %v481 = vpop.f32.mrb[0].mxu0
  %v482 = vadd.f32 0.0, %v481
  %483 = vdwg.mxu0
  %484 = vmatprep.subr.bf16.mxu0 0
  %485 = vmatpush1.bf16.msra.mxu0 %v207
  %486 = vmatprep.subr.bf16.mxu0 0
  %487 = vmatpush1.bf16.msra.mxu0 %v216
  %488 = vmatprep.subr.bf16.mxu0 0
  %489 = vmatpush1.bf16.msra.mxu0 %v225
  %490 = vmatprep.subr.bf16.mxu0 0
  %491 = vmatpush1.bf16.msra.mxu0 %v234
  %492 = vmatprep.subr.bf16.mxu0 0
  %493 = vmatpush1.bf16.msra.mxu0 %v310
  %494 = vmatprep.subr.bf16.mxu0 0
  %495 = vmatpush1.bf16.msra.mxu0 0
  %496 = vmatprep.subr.bf16.mxu0 0
  %497 = vmatpush1.bf16.msra.mxu0 0
  %498 = vmatprep.subr.bf16.mxu0 0
  %499 = vmatpush1.bf16.msra.mxu0 0
  %500 = vmatprep.subr.bf16.mxu0 0
  %501 = vmatpush1.bf16.msra.mxu0 0
  %502 = vmatprep.subr.bf16.mxu0 0
  %503 = vmatpush1.bf16.msra.mxu0 0
  %504 = vmatprep.subr.bf16.mxu0 0
  %505 = vmatpush1.bf16.msra.mxu0 0
  %506 = vmatprep.subr.bf16.mxu0 0
  %507 = vmatpush1.bf16.msra.mxu0 0
  %508 = vmatprep.subr.bf16.mxu0 0
  %509 = vmatpush1.bf16.msra.mxu0 0
  %510 = vmatprep.subr.bf16.mxu0 0
  %511 = vmatpush1.bf16.msra.mxu0 0
  %512 = vmatprep.subr.bf16.mxu0 0
  %513 = vmatpush1.bf16.msra.mxu0 0
  %514 = vmatprep.subr.bf16.mxu0 0
  %515 = vmatpush1.bf16.msra.mxu0 0
  %516 = vmatprep.mubr.bf16.mxu0 0
  %517 = vmatmul.mubr.bf16.gmra.mrb[0].mxu0 %v282
  %v518 = vpop.f32.mrb[0].mxu0
  %v519 = vadd.f32 0.0, %v518
  %v520 = vpop.f32.mrb[0].mxu0
  %v521 = vpop.f32.mrb[0].mxu0
  %v522 = vadd.f32 0.0, %v521
  %v523 = vpop.f32.mrb[0].mxu0
  %524 = vdwg.mxu0
  %v525 = vmax.f32 %v347, 0.0
  %v526 = vmax.f32 %v349, 0.0
  %v527 = vmax.f32 %v390, 0.0
  %v528 = vmax.f32 %v392, 0.0
  %v529 = vmax.f32 %v433, 0.0
  %v530 = vmax.f32 %v435, 0.0
  %v531 = vmax.f32 %v476, 0.0
  %v532 = vmax.f32 %v478, 0.0
  %v533 = vmax.f32 %v519, 0.0
  %v534 = vmax.f32 %v351, 0.0
  %v535 = vmax.f32 %v353, 0.0
  %v536 = vmax.f32 %v394, 0.0
  %v537 = vmax.f32 %v396, 0.0
  %v538 = vmax.f32 %v437, 0.0
  %v539 = vmax.f32 %v439, 0.0
  %v540 = vmax.f32 %v480, 0.0
  %v541 = vmax.f32 %v482, 0.0
  %v542 = vmax.f32 %v522, 0.0
  %v543 = vld [vmem:[%s2] sm:$0xff]
  %v544 = vld [vmem:[%s2 + $0x8] sm:$0xff]
  %546 = vset.pattern.permute.xlu0 0
  %547 = vperm.xlu0 %546, %v543
  %v548 = vpop.permute.xlu0 %547
  %551 = vset.pattern.permute.xlu0 0
  %552 = vperm.xlu0 %551, %v544
  %v553 = vpop.permute.xlu0 %552
  %v555 = vmul.f32 %v525, %v548
  %v556 = vmul.f32 %v526, %v548
  %v557 = vmul.f32 %v527, %v548
  %v558 = vmul.f32 %v528, %v548
  %v559 = vmul.f32 %v529, %v548
  %v560 = vmul.f32 %v530, %v548
  %v561 = vmul.f32 %v531, %v548
  %v562 = vmul.f32 %v532, %v548
  %v563 = vmul.f32 %v533, %v548
  %v564 = vmul.f32 %v534, %v553
  %v565 = vmul.f32 %v535, %v553
  %v566 = vmul.f32 %v536, %v553
  %v567 = vmul.f32 %v537, %v553
  %v568 = vmul.f32 %v538, %v553
  %v569 = vmul.f32 %v539, %v553
  %v570 = vmul.f32 %v540, %v553
  %v571 = vmul.f32 %v541, %v553
  %v572 = vmul.f32 %v542, %v553
  %v573 = vld [vmem:[%s3] sm:$0xff]
  %v574 = vld [vmem:[%s3 + $0x8] sm:$0xff]
  %576 = vset.pattern.permute.xlu0 0
  %577 = vperm.xlu0 %576, %v573
  %v578 = vpop.permute.xlu0 %577
  %581 = vset.pattern.permute.xlu0 0
  %582 = vperm.xlu0 %581, %v574
  %v583 = vpop.permute.xlu0 %582
  %v585 = vadd.f32 %v555, %v578
  %v586 = vadd.f32 %v556, %v578
  %v587 = vadd.f32 %v557, %v578
  %v588 = vadd.f32 %v558, %v578
  %v589 = vadd.f32 %v559, %v578
  %v590 = vadd.f32 %v560, %v578
  %v591 = vadd.f32 %v561, %v578
  %v592 = vadd.f32 %v562, %v578
  %v593 = vadd.f32 %v563, %v578
  %v594 = vadd.f32 %v564, %v583
  %v595 = vadd.f32 %v565, %v583
  %v596 = vadd.f32 %v566, %v583
  %v597 = vadd.f32 %v567, %v583
  %v598 = vadd.f32 %v568, %v583
  %v599 = vadd.f32 %v569, %v583
  %v600 = vadd.f32 %v570, %v583
  %v601 = vadd.f32 %v571, %v583
  %v602 = vadd.f32 %v572, %v583
  %v603 = vld [vmem:[%s4] sm:$0xf]
  %v604 = vpack.c.bf16 %v594, %v585
  %v605 = vpack.c.bf16 %v595, %v586
  %v606 = vpack.c.bf16 %v596, %v587
  %v607 = vpack.c.bf16 %v597, %v588
  %v608 = vpack.c.bf16 %v598, %v589
  %v609 = vpack.c.bf16 %v599, %v590
  %v610 = vpack.c.bf16 %v600, %v591
  %v611 = vpack.c.bf16 %v601, %v592
  %v612 = vpack.c.bf16 %v602, %v593
  %vm613 = vcmask 130048
  %v615 = vsel %vm613, %v603, 0
  %617 = vmatprep.subr.bf16.mxu0 %v605
  %618 = vmatpush1.bf16.msra.mxu0 %v604
  %619 = vmatprep.subr.bf16.mxu0 0
  %620 = vmatpush1.bf16.msra.mxu0 0
  %621 = vmatprep.subr.bf16.mxu0 0
  %622 = vmatpush1.bf16.msra.mxu0 0
  %623 = vmatprep.subr.bf16.mxu0 0
  %624 = vmatpush1.bf16.msra.mxu0 0
  %625 = vmatprep.subr.bf16.mxu0 0
  %626 = vmatpush1.bf16.msra.mxu0 0
  %627 = vmatprep.subr.bf16.mxu0 0
  %628 = vmatpush1.bf16.msra.mxu0 0
  %629 = vmatprep.subr.bf16.mxu0 0
  %630 = vmatpush1.bf16.msra.mxu0 0
  %631 = vmatprep.subr.bf16.mxu0 0
  %632 = vmatpush1.bf16.msra.mxu0 0
  %633 = vmatprep.subr.bf16.mxu0 0
  %634 = vmatpush1.bf16.msra.mxu0 0
  %635 = vmatprep.subr.bf16.mxu0 0
  %636 = vmatpush1.bf16.msra.mxu0 0
  %637 = vmatprep.subr.bf16.mxu0 0
  %638 = vmatpush1.bf16.msra.mxu0 0
  %639 = vmatprep.subr.bf16.mxu0 0
  %640 = vmatpush1.bf16.msra.mxu0 0
  %641 = vmatprep.subr.bf16.mxu0 0
  %642 = vmatpush1.bf16.msra.mxu0 0
  %643 = vmatprep.subr.bf16.mxu0 0
  %644 = vmatpush1.bf16.msra.mxu0 0
  %645 = vmatprep.subr.bf16.mxu0 0
  %646 = vmatpush1.bf16.msra.mxu0 0
  %647 = vmatprep.subr.bf16.mxu0 0
  %648 = vmatpush1.bf16.msra.mxu0 0
  %649 = vmatprep.mubr.bf16.mxu0 0
  %650 = vmatmul.mubr.bf16.gmra.mrb[0].mxu0 %v615
  %v651 = vpop.f32.mrb[0].mxu0
  %v652 = vadd.f32 0.0, %v651
  %v653 = vpop.f32.mrb[0].mxu0
  %v654 = vadd.f32 0.0, %v653
  %v655 = vpop.f32.mrb[0].mxu0
  %v656 = vpop.f32.mrb[0].mxu0
  %657 = vdwg.mxu0
  %658 = vmatprep.subr.bf16.mxu0 %v607
  %659 = vmatpush1.bf16.msra.mxu0 %v606
  %660 = vmatprep.subr.bf16.mxu0 0
  %661 = vmatpush1.bf16.msra.mxu0 0
  %662 = vmatprep.subr.bf16.mxu0 0
  %663 = vmatpush1.bf16.msra.mxu0 0
  %664 = vmatprep.subr.bf16.mxu0 0
  %665 = vmatpush1.bf16.msra.mxu0 0
  %666 = vmatprep.subr.bf16.mxu0 0
  %667 = vmatpush1.bf16.msra.mxu0 0
  %668 = vmatprep.subr.bf16.mxu0 0
  %669 = vmatpush1.bf16.msra.mxu0 0
  %670 = vmatprep.subr.bf16.mxu0 0
  %671 = vmatpush1.bf16.msra.mxu0 0
  %672 = vmatprep.subr.bf16.mxu0 0
  %673 = vmatpush1.bf16.msra.mxu0 0
  %674 = vmatprep.subr.bf16.mxu0 0
  %675 = vmatpush1.bf16.msra.mxu0 0
  %676 = vmatprep.subr.bf16.mxu0 0
  %677 = vmatpush1.bf16.msra.mxu0 0
  %678 = vmatprep.subr.bf16.mxu0 0
  %679 = vmatpush1.bf16.msra.mxu0 0
  %680 = vmatprep.subr.bf16.mxu0 0
  %681 = vmatpush1.bf16.msra.mxu0 0
  %682 = vmatprep.subr.bf16.mxu0 0
  %683 = vmatpush1.bf16.msra.mxu0 0
  %684 = vmatprep.subr.bf16.mxu0 0
  %685 = vmatpush1.bf16.msra.mxu0 0
  %686 = vmatprep.subr.bf16.mxu0 0
  %687 = vmatpush1.bf16.msra.mxu0 0
  %688 = vmatprep.subr.bf16.mxu0 0
  %689 = vmatpush1.bf16.msra.mxu0 0
  %690 = vmatprep.mubr.bf16.mxu0 0
  %691 = vmatmul.mubr.bf16.gmra.mrb[0].mxu0 %v615
  %v692 = vpop.f32.mrb[0].mxu0
  %v693 = vadd.f32 0.0, %v692
  %v694 = vpop.f32.mrb[0].mxu0
  %v695 = vadd.f32 0.0, %v694
  %v696 = vpop.f32.mrb[0].mxu0
  %v697 = vpop.f32.mrb[0].mxu0
  %698 = vdwg.mxu0
  %699 = vmatprep.subr.bf16.mxu0 %v609
  %700 = vmatpush1.bf16.msra.mxu0 %v608
  %701 = vmatprep.subr.bf16.mxu0 0
  %702 = vmatpush1.bf16.msra.mxu0 0
  %703 = vmatprep.subr.bf16.mxu0 0
  %704 = vmatpush1.bf16.msra.mxu0 0
  %705 = vmatprep.subr.bf16.mxu0 0
  %706 = vmatpush1.bf16.msra.mxu0 0
  %707 = vmatprep.subr.bf16.mxu0 0
  %708 = vmatpush1.bf16.msra.mxu0 0
  %709 = vmatprep.subr.bf16.mxu0 0
  %710 = vmatpush1.bf16.msra.mxu0 0
  %711 = vmatprep.subr.bf16.mxu0 0
  %712 = vmatpush1.bf16.msra.mxu0 0
  %713 = vmatprep.subr.bf16.mxu0 0
  %714 = vmatpush1.bf16.msra.mxu0 0
  %715 = vmatprep.subr.bf16.mxu0 0
  %716 = vmatpush1.bf16.msra.mxu0 0
  %717 = vmatprep.subr.bf16.mxu0 0
  %718 = vmatpush1.bf16.msra.mxu0 0
  %719 = vmatprep.subr.bf16.mxu0 0
  %720 = vmatpush1.bf16.msra.mxu0 0
  %721 = vmatprep.subr.bf16.mxu0 0
  %722 = vmatpush1.bf16.msra.mxu0 0
  %723 = vmatprep.subr.bf16.mxu0 0
  %724 = vmatpush1.bf16.msra.mxu0 0
  %725 = vmatprep.subr.bf16.mxu0 0
  %726 = vmatpush1.bf16.msra.mxu0 0
  %727 = vmatprep.subr.bf16.mxu0 0
  %728 = vmatpush1.bf16.msra.mxu0 0
  %729 = vmatprep.subr.bf16.mxu0 0
  %730 = vmatpush1.bf16.msra.mxu0 0
  %731 = vmatprep.mubr.bf16.mxu0 0
  %732 = vmatmul.mubr.bf16.gmra.mrb[0].mxu0 %v615
  %v733 = vpop.f32.mrb[0].mxu0
  %v734 = vadd.f32 0.0, %v733
  %v735 = vpop.f32.mrb[0].mxu0
  %v736 = vadd.f32 0.0, %v735
  %v737 = vpop.f32.mrb[0].mxu0
  %v738 = vpop.f32.mrb[0].mxu0
  %739 = vdwg.mxu0
  %740 = vmatprep.subr.bf16.mxu0 %v611
  %741 = vmatpush1.bf16.msra.mxu0 %v610
  %742 = vmatprep.subr.bf16.mxu0 0
  %743 = vmatpush1.bf16.msra.mxu0 0
  %744 = vmatprep.subr.bf16.mxu0 0
  %745 = vmatpush1.bf16.msra.mxu0 0
  %746 = vmatprep.subr.bf16.mxu0 0
  %747 = vmatpush1.bf16.msra.mxu0 0
  %748 = vmatprep.subr.bf16.mxu0 0
  %749 = vmatpush1.bf16.msra.mxu0 0
  %750 = vmatprep.subr.bf16.mxu0 0
  %751 = vmatpush1.bf16.msra.mxu0 0
  %752 = vmatprep.subr.bf16.mxu0 0
  %753 = vmatpush1.bf16.msra.mxu0 0
  %754 = vmatprep.subr.bf16.mxu0 0
  %755 = vmatpush1.bf16.msra.mxu0 0
  %756 = vmatprep.subr.bf16.mxu0 0
  %757 = vmatpush1.bf16.msra.mxu0 0
  %758 = vmatprep.subr.bf16.mxu0 0
  %759 = vmatpush1.bf16.msra.mxu0 0
  %760 = vmatprep.subr.bf16.mxu0 0
  %761 = vmatpush1.bf16.msra.mxu0 0
  %762 = vmatprep.subr.bf16.mxu0 0
  %763 = vmatpush1.bf16.msra.mxu0 0
  %764 = vmatprep.subr.bf16.mxu0 0
  %765 = vmatpush1.bf16.msra.mxu0 0
  %766 = vmatprep.subr.bf16.mxu0 0
  %767 = vmatpush1.bf16.msra.mxu0 0
  %768 = vmatprep.subr.bf16.mxu0 0
  %769 = vmatpush1.bf16.msra.mxu0 0
  %770 = vmatprep.subr.bf16.mxu0 0
  %771 = vmatpush1.bf16.msra.mxu0 0
  %772 = vmatprep.mubr.bf16.mxu0 0
  %773 = vmatmul.mubr.bf16.gmra.mrb[0].mxu0 %v615
  %v774 = vpop.f32.mrb[0].mxu0
  %v775 = vadd.f32 0.0, %v774
  %v776 = vpop.f32.mrb[0].mxu0
  %v777 = vadd.f32 0.0, %v776
  %v778 = vpop.f32.mrb[0].mxu0
  %v779 = vpop.f32.mrb[0].mxu0
  %780 = vdwg.mxu0
  %781 = vmatprep.subr.bf16.mxu0 0
  %782 = vmatpush1.bf16.msra.mxu0 %v612
  %783 = vmatprep.subr.bf16.mxu0 0
  %784 = vmatpush1.bf16.msra.mxu0 0
  %785 = vmatprep.subr.bf16.mxu0 0
  %786 = vmatpush1.bf16.msra.mxu0 0
  %787 = vmatprep.subr.bf16.mxu0 0
  %788 = vmatpush1.bf16.msra.mxu0 0
  %789 = vmatprep.subr.bf16.mxu0 0
  %790 = vmatpush1.bf16.msra.mxu0 0
  %791 = vmatprep.subr.bf16.mxu0 0
  %792 = vmatpush1.bf16.msra.mxu0 0
  %793 = vmatprep.subr.bf16.mxu0 0
  %794 = vmatpush1.bf16.msra.mxu0 0
  %795 = vmatprep.subr.bf16.mxu0 0
  %796 = vmatpush1.bf16.msra.mxu0 0
  %797 = vmatprep.subr.bf16.mxu0 0
  %798 = vmatpush1.bf16.msra.mxu0 0
  %799 = vmatprep.subr.bf16.mxu0 0
  %800 = vmatpush1.bf16.msra.mxu0 0
  %801 = vmatprep.subr.bf16.mxu0 0
  %802 = vmatpush1.bf16.msra.mxu0 0
  %803 = vmatprep.subr.bf16.mxu0 0
  %804 = vmatpush1.bf16.msra.mxu0 0
  %805 = vmatprep.subr.bf16.mxu0 0
  %806 = vmatpush1.bf16.msra.mxu0 0
  %807 = vmatprep.subr.bf16.mxu0 0
  %808 = vmatpush1.bf16.msra.mxu0 0
  %809 = vmatprep.subr.bf16.mxu0 0
  %810 = vmatpush1.bf16.msra.mxu0 0
  %811 = vmatprep.subr.bf16.mxu0 0
  %812 = vmatpush1.bf16.msra.mxu0 0
  %813 = vmatprep.mubr.bf16.mxu0 0
  %814 = vmatmul.mubr.bf16.gmra.mrb[0].mxu0 %v615
  %v815 = vpop.f32.mrb[0].mxu0
  %v816 = vadd.f32 0.0, %v815
  %v817 = vpop.f32.mrb[0].mxu0
  %v818 = vpop.f32.mrb[0].mxu0
  %v819 = vpop.f32.mrb[0].mxu0
  %820 = vdwg.mxu0
  %821 = vst [vmem:[%s5] sm:$0xff] %v652
  %822 = vst [vmem:[%s5 + $0x8] sm:$0xff] %v654
  %823 = vst [vmem:[%s5 + $0x10] sm:$0xff] %v693
  %824 = vst [vmem:[%s5 + $0x18] sm:$0xff] %v695
  %825 = vst [vmem:[%s5 + $0x20] sm:$0xff] %v734
  %826 = vst [vmem:[%s5 + $0x28] sm:$0xff] %v736
  %827 = vst [vmem:[%s5 + $0x30] sm:$0xff] %v775
  %828 = vst [vmem:[%s5 + $0x38] sm:$0xff] %v777
  %829 = vst [vmem:[%s5 + $0x40] sm:$0xff] %v816
  // Predicated region
  $region22: #{_lambda_.8} parent=0 // pred_check
    _
  $region23: #{_lambda_.8} parent=0 // pred_check_branch
    %831 = sbr.rel (0) target = $region25
  $region24: #{_lambda_.8} parent=0 // pred_region
    _
  $region25: #{_lambda_.8} parent=0 // pred_fallthru
    _
  // Predicated region
  $region26: #{_lambda_.8} parent=0 // pred_check
    _
  $region27: #{_lambda_.8} parent=0 // pred_check_branch
    %833 = sbr.rel (0) target = $region29
  $region28: #{_lambda_.8} parent=0 // pred_region
    _
  $region29: #{_lambda_.8} parent=0 // pred_fallthru
    _

// kernel: _lambda_.9
$region0: #{_lambda_.9}
  #allocation0 [shape = 'u32[]', space=smem, size = 0x4, offset = 0x4, fixed_abs, tag = 'smem constant byte address 0x4 - core index']
  #allocation1 [shape = 'u32[144,128]{1,0:T(1,128)}', space=vmem, size = 0x12000, scoped, tag = 'internal scratch']
  %s0 = inlined_call_operand.vmem [shape: bf16[72,256], index: 0, kind: input, shape index: {}]
  %s1 = inlined_call_operand.vmem [shape: bf16[16,72], index: 1, kind: input, shape index: {}]
  %s2 = inlined_call_operand.vmem [shape: f32[16,1], index: 2, kind: input, shape index: {}]
  %s3 = inlined_call_operand.vmem [shape: f32[16,1], index: 3, kind: input, shape index: {}]
  %s4 = inlined_call_operand.vmem [shape: f32[16,256], index: 4, kind: output, shape index: {}]
  %s5 = sld [smem:[#allocation0]]
  $region26: #{_lambda_.9} parent=0
    _
  %s7 = ssub.s32 1, %s5
  %s8 = scalar_select 0, %s7, %s5
  // Predicated region
  $region2: #{_lambda_.9} parent=0 // pred_check
    _
  $region3: #{_lambda_.9} parent=0 // pred_check_branch
    %10 = sbr.rel (0) target = $region5
  $region4: #{_lambda_.9} parent=0 // pred_region
    _
  $region5: #{_lambda_.9} parent=0 // pred_fallthru
    _
  // Predicated region
  $region6: #{_lambda_.9} parent=0 // pred_check
    _
  $region7: #{_lambda_.9} parent=0 // pred_check_branch
    %12 = sbr.rel (0) target = $region9
  $region8: #{_lambda_.9} parent=0 // pred_region
    _
  $region9: #{_lambda_.9} parent=0 // pred_fallthru
    _
  // Predicated region
  $region10: #{_lambda_.9} parent=0 // pred_check
    _
  $region11: #{_lambda_.9} parent=0 // pred_check_branch
    %14 = sbr.rel (0) target = $region13
  $region12: #{_lambda_.9} parent=0 // pred_region
    _
  $region13: #{_lambda_.9} parent=0 // pred_fallthru
    _
  // Predicated region
  $region14: #{_lambda_.9} parent=0 // pred_check
    _
  $region15: #{_lambda_.9} parent=0 // pred_check_branch
    %16 = sbr.rel (0) target = $region17
  $region16: #{_lambda_.9} parent=0 // pred_region
    _
  $region17: #{_lambda_.9} parent=0 // pred_fallthru
    _
  %v18 = vld [vmem:[%s1] sm:$0xf]
  %v19 = vld [vmem:[%s1 + $0x4] sm:$0xf]
  %v20 = vld [vmem:[%s0] sm:$0xff]
  %v21 = vld [vmem:[%s0 + $0x8] sm:$0xff]
  %v22 = vld [vmem:[%s0 + $0x10] sm:$0xff]
  %v23 = vld [vmem:[%s0 + $0x18] sm:$0xff]
  %v24 = vld [vmem:[%s0 + $0x20] sm:$0xff]
  %v25 = vld [vmem:[%s0 + $0x28] sm:$0xff]
  %v26 = vld [vmem:[%s0 + $0x30] sm:$0xff]
  %v27 = vld [vmem:[%s0 + $0x38] sm:$0xff]
  %v28 = vld [vmem:[%s0 + $0x40] sm:$0xff]
  %v31 = vunpack.c.l.b16 %v18
  %v32 = vunpack.c.l.b16 %v19
  %v33 = vpack.c.b16 %v32, %v31
  %v43 = vunpack.c.l.b16 %v20
  %v44 = vunpack.c.h.b16 %v20
  %v45 = vunpack.c.l.b16 %v21
  %v46 = vunpack.c.h.b16 %v21
  %v47 = vunpack.c.l.b16 %v22
  %v48 = vunpack.c.h.b16 %v22
  %v49 = vunpack.c.l.b16 %v23
  %v50 = vunpack.c.h.b16 %v23
  %v51 = vunpack.c.l.b16 %v24
  %v52 = vunpack.c.h.b16 %v24
  %v53 = vunpack.c.l.b16 %v25
  %v54 = vunpack.c.h.b16 %v25
  %v55 = vunpack.c.l.b16 %v26
  %v56 = vunpack.c.h.b16 %v26
  %v57 = vunpack.c.l.b16 %v27
  %v58 = vunpack.c.h.b16 %v27
  %v59 = vunpack.c.l.b16 %v28
  %v60 = vunpack.c.h.b16 %v28
  %v61 = vpack.c.b16 %v45, %v43
  %v62 = vpack.c.b16 %v46, %v44
  %v63 = vpack.c.b16 %v49, %v47
  %v64 = vpack.c.b16 %v50, %v48
  %v65 = vpack.c.b16 %v53, %v51
  %v66 = vpack.c.b16 %v54, %v52
  %v67 = vpack.c.b16 %v57, %v55
  %v68 = vpack.c.b16 %v58, %v56
  %v69 = vpack.c.b16 %v59, %v59
  %v70 = vpack.c.b16 %v60, %v60
  %vm79 = vcmask 588800
  %v81 = vsel %vm79, %v33, 0
  %vm83 = vcmask 1043456
  %v85 = vsel %vm83, %v69, 0
  %v88 = vsel %vm83, %v70, 0
  %90 = vmatprep.subr.bf16.mxu0 %v62
  %91 = vmatpush1.bf16.msra.mxu0 %v61
  %92 = vmatprep.subr.bf16.mxu0 %v64
  %93 = vmatpush1.bf16.msra.mxu0 %v63
  %94 = vmatprep.subr.bf16.mxu0 %v66
  %95 = vmatpush1.bf16.msra.mxu0 %v65
  %96 = vmatprep.subr.bf16.mxu0 %v68
  %97 = vmatpush1.bf16.msra.mxu0 %v67
  %98 = vmatprep.subr.bf16.mxu0 %v88
  %99 = vmatpush1.bf16.msra.mxu0 %v85
  %100 = vmatprep.subr.bf16.mxu0 0
  %101 = vmatpush1.bf16.msra.mxu0 0
  %102 = vmatprep.subr.bf16.mxu0 0
  %103 = vmatpush1.bf16.msra.mxu0 0
  %104 = vmatprep.subr.bf16.mxu0 0
  %105 = vmatpush1.bf16.msra.mxu0 0
  %106 = vmatprep.subr.bf16.mxu0 0
  %107 = vmatpush1.bf16.msra.mxu0 0
  %108 = vmatprep.subr.bf16.mxu0 0
  %109 = vmatpush1.bf16.msra.mxu0 0
  %110 = vmatprep.subr.bf16.mxu0 0
  %111 = vmatpush1.bf16.msra.mxu0 0
  %112 = vmatprep.subr.bf16.mxu0 0
  %113 = vmatpush1.bf16.msra.mxu0 0
  %114 = vmatprep.subr.bf16.mxu0 0
  %115 = vmatpush1.bf16.msra.mxu0 0
  %116 = vmatprep.subr.bf16.mxu0 0
  %117 = vmatpush1.bf16.msra.mxu0 0
  %118 = vmatprep.subr.bf16.mxu0 0
  %119 = vmatpush1.bf16.msra.mxu0 0
  %120 = vmatprep.subr.bf16.mxu0 0
  %121 = vmatpush1.bf16.msra.mxu0 0
  %122 = vmatprep.mubr.bf16.mxu0 0
  %123 = vmatmul.mubr.bf16.gmra.mrb[0].mxu0 %v81
  %v124 = vpop.f32.mrb[0].mxu0
  %v125 = vadd.f32 0.0, %v124
  %v126 = vpop.f32.mrb[0].mxu0
  %v127 = vadd.f32 0.0, %v126
  %v128 = vpop.f32.mrb[0].mxu0
  %v129 = vadd.f32 0.0, %v128
  %v130 = vpop.f32.mrb[0].mxu0
  %v131 = vadd.f32 0.0, %v130
  %132 = vdwg.mxu0
  %v133 = vmax.f32 %v125, 0.0
  %v134 = vmax.f32 %v127, 0.0
  %v135 = vmax.f32 %v129, 0.0
  %v136 = vmax.f32 %v131, 0.0
  %v137 = vld [vmem:[%s2] sm:$0xff]
  %v138 = vld [vmem:[%s2 + $0x8] sm:$0xff]
  %140 = vset.pattern.permute.xlu0 0
  %141 = vperm.xlu0 %140, %v137
  %v142 = vpop.permute.xlu0 %141
  %145 = vset.pattern.permute.xlu0 0
  %146 = vperm.xlu0 %145, %v138
  %v147 = vpop.permute.xlu0 %146
  %v149 = vmul.f32 %v133, %v142
  %v150 = vmul.f32 %v134, %v142
  %v151 = vmul.f32 %v135, %v147
  %v152 = vmul.f32 %v136, %v147
  %v153 = vld [vmem:[%s3] sm:$0xff]
  %v154 = vld [vmem:[%s3 + $0x8] sm:$0xff]
  %156 = vset.pattern.permute.xlu0 0
  %157 = vperm.xlu0 %156, %v153
  %v158 = vpop.permute.xlu0 %157
  %161 = vset.pattern.permute.xlu0 0
  %162 = vperm.xlu0 %161, %v154
  %v163 = vpop.permute.xlu0 %162
  %v165 = vadd.f32 %v149, %v158
  %v166 = vadd.f32 %v150, %v158
  %v167 = vadd.f32 %v151, %v163
  %v168 = vadd.f32 %v152, %v163
  %169 = vst [vmem:[%s4] sm:$0xff] %v165
  %170 = vst [vmem:[%s4 + $0x8] sm:$0xff] %v166
  %171 = vst [vmem:[%s4 + $0x10] sm:$0xff] %v167
  %172 = vst [vmem:[%s4 + $0x18] sm:$0xff] %v168
  // Predicated region
  $region18: #{_lambda_.9} parent=0 // pred_check
    _
  $region19: #{_lambda_.9} parent=0 // pred_check_branch
    %174 = sbr.rel (0) target = $region21
  $region20: #{_lambda_.9} parent=0 // pred_region
    _
  $region21: #{_lambda_.9} parent=0 // pred_fallthru
    _
  // Predicated region
  $region22: #{_lambda_.9} parent=0 // pred_check
    _
  $region23: #{_lambda_.9} parent=0 // pred_check_branch
    %176 = sbr.rel (0) target = $region25
  $region24: #{_lambda_.9} parent=0 // pred_region
    _
  $region25: #{_lambda_.9} parent=0 // pred_fallthru
    _

// kernel: _lambda_.10
$region0: #{_lambda_.10}
  #allocation0 [shape = 'u32[]', space=smem, size = 0x4, offset = 0x4, fixed_abs, tag = 'smem constant byte address 0x4 - core index']
  #allocation1 [shape = 'u32[144,128]{1,0:T(1,128)}', space=vmem, size = 0x12000, scoped, tag = 'internal scratch']
  %s0 = inlined_call_operand.vmem [shape: bf16[144,128], index: 0, kind: input, shape index: {}]
  %s1 = inlined_call_operand.vmem [shape: bf16[8,144], index: 1, kind: input, shape index: {}]
  %s2 = inlined_call_operand.vmem [shape: f32[8,1], index: 2, kind: input, shape index: {}]
  %s3 = inlined_call_operand.vmem [shape: f32[8,1], index: 3, kind: input, shape index: {}]
  %s4 = inlined_call_operand.vmem [shape: f32[8,128], index: 4, kind: output, shape index: {}]
  %s5 = sld [smem:[#allocation0]]
  $region26: #{_lambda_.10} parent=0
    _
  %s7 = ssub.s32 1, %s5
  %s8 = scalar_select 0, %s7, %s5
  // Predicated region
  $region2: #{_lambda_.10} parent=0 // pred_check
    _
  $region3: #{_lambda_.10} parent=0 // pred_check_branch
    %10 = sbr.rel (0) target = $region5
  $region4: #{_lambda_.10} parent=0 // pred_region
    _
  $region5: #{_lambda_.10} parent=0 // pred_fallthru
    _
  // Predicated region
  $region6: #{_lambda_.10} parent=0 // pred_check
    _
  $region7: #{_lambda_.10} parent=0 // pred_check_branch
    %12 = sbr.rel (0) target = $region9
  $region8: #{_lambda_.10} parent=0 // pred_region
    _
  $region9: #{_lambda_.10} parent=0 // pred_fallthru
    _
  // Predicated region
  $region10: #{_lambda_.10} parent=0 // pred_check
    _
  $region11: #{_lambda_.10} parent=0 // pred_check_branch
    %14 = sbr.rel (0) target = $region13
  $region12: #{_lambda_.10} parent=0 // pred_region
    _
  $region13: #{_lambda_.10} parent=0 // pred_fallthru
    _
  // Predicated region
  $region14: #{_lambda_.10} parent=0 // pred_check
    _
  $region15: #{_lambda_.10} parent=0 // pred_check_branch
    %16 = sbr.rel (0) target = $region17
  $region16: #{_lambda_.10} parent=0 // pred_region
    _
  $region17: #{_lambda_.10} parent=0 // pred_fallthru
    _
  %v18 = vld [vmem:[%s1] sm:$0xff]
  %v19 = vld [vmem:[%s0] sm:$0xf]
  %v20 = vld [vmem:[%s0 + $0x4] sm:$0xf]
  %v21 = vld [vmem:[%s0 + $0x8] sm:$0xf]
  %v22 = vld [vmem:[%s0 + $0xc] sm:$0xf]
  %v23 = vld [vmem:[%s0 + $0x10] sm:$0xf]
  %v24 = vld [vmem:[%s0 + $0x14] sm:$0xf]
  %v25 = vld [vmem:[%s0 + $0x18] sm:$0xf]
  %v26 = vld [vmem:[%s0 + $0x1c] sm:$0xf]
  %v27 = vld [vmem:[%s0 + $0x20] sm:$0xf]
  %v28 = vld [vmem:[%s0 + $0x24] sm:$0xf]
  %v29 = vld [vmem:[%s0 + $0x28] sm:$0xf]
  %v30 = vld [vmem:[%s0 + $0x2c] sm:$0xf]
  %v31 = vld [vmem:[%s0 + $0x30] sm:$0xf]
  %v32 = vld [vmem:[%s0 + $0x34] sm:$0xf]
  %v33 = vld [vmem:[%s0 + $0x38] sm:$0xf]
  %v34 = vld [vmem:[%s0 + $0x3c] sm:$0xf]
  %v35 = vld [vmem:[%s0 + $0x40] sm:$0xf]
  %v36 = vld [vmem:[%s0 + $0x44] sm:$0xf]
  %v38 = vunpack.c.l.b16 %v18
  %v39 = vunpack.c.h.b16 %v18
  %v40 = vpack.c.b16 %v38, %v38
  %v41 = vpack.c.b16 %v39, %v39
  %v61 = vunpack.c.l.b16 %v19
  %v62 = vunpack.c.l.b16 %v20
  %v63 = vunpack.c.l.b16 %v21
  %v64 = vunpack.c.l.b16 %v22
  %v65 = vunpack.c.l.b16 %v23
  %v66 = vunpack.c.l.b16 %v24
  %v67 = vunpack.c.l.b16 %v25
  %v68 = vunpack.c.l.b16 %v26
  %v69 = vunpack.c.l.b16 %v27
  %v70 = vunpack.c.l.b16 %v28
  %v71 = vunpack.c.l.b16 %v29
  %v72 = vunpack.c.l.b16 %v30
  %v73 = vunpack.c.l.b16 %v31
  %v74 = vunpack.c.l.b16 %v32
  %v75 = vunpack.c.l.b16 %v33
  %v76 = vunpack.c.l.b16 %v34
  %v77 = vunpack.c.l.b16 %v35
  %v78 = vunpack.c.l.b16 %v36
  %v79 = vpack.c.b16 %v62, %v61
  %v80 = vpack.c.b16 %v64, %v63
  %v81 = vpack.c.b16 %v66, %v65
  %v82 = vpack.c.b16 %v68, %v67
  %v83 = vpack.c.b16 %v70, %v69
  %v84 = vpack.c.b16 %v72, %v71
  %v85 = vpack.c.b16 %v74, %v73
  %v86 = vpack.c.b16 %v76, %v75
  %v87 = vpack.c.b16 %v78, %v77
  %vm97 = vcmask 130048
  %v99 = vsel %vm97, %v41, 0
  %101 = vmatprep.subr.bf16.mxu0 0
  %102 = vmatpush1.bf16.msra.mxu0 %v79
  %103 = vmatprep.subr.bf16.mxu0 0
  %104 = vmatpush1.bf16.msra.mxu0 %v80
  %105 = vmatprep.subr.bf16.mxu0 0
  %106 = vmatpush1.bf16.msra.mxu0 %v81
  %107 = vmatprep.subr.bf16.mxu0 0
  %108 = vmatpush1.bf16.msra.mxu0 %v82
  %109 = vmatprep.subr.bf16.mxu0 0
  %110 = vmatpush1.bf16.msra.mxu0 %v83
  %111 = vmatprep.subr.bf16.mxu0 0
  %112 = vmatpush1.bf16.msra.mxu0 %v84
  %113 = vmatprep.subr.bf16.mxu0 0
  %114 = vmatpush1.bf16.msra.mxu0 %v85
  %115 = vmatprep.subr.bf16.mxu0 0
  %116 = vmatpush1.bf16.msra.mxu0 %v86
  %117 = vmatprep.subr.bf16.mxu0 0
  %118 = vmatpush1.bf16.msra.mxu0 %v87
  %119 = vmatprep.subr.bf16.mxu0 0
  %120 = vmatpush1.bf16.msra.mxu0 0
  %121 = vmatprep.subr.bf16.mxu0 0
  %122 = vmatpush1.bf16.msra.mxu0 0
  %123 = vmatprep.subr.bf16.mxu0 0
  %124 = vmatpush1.bf16.msra.mxu0 0
  %125 = vmatprep.subr.bf16.mxu0 0
  %126 = vmatpush1.bf16.msra.mxu0 0
  %127 = vmatprep.subr.bf16.mxu0 0
  %128 = vmatpush1.bf16.msra.mxu0 0
  %129 = vmatprep.subr.bf16.mxu0 0
  %130 = vmatpush1.bf16.msra.mxu0 0
  %131 = vmatprep.subr.bf16.mxu0 0
  %132 = vmatpush1.bf16.msra.mxu0 0
  %133 = vmatprep.mubr.bf16.mxu0 %v99
  %134 = vmatmul.mubr.bf16.gmra.mrb[0].mxu0 %v40
  %v135 = vpop.f32.mrb[0].mxu0
  %v136 = vadd.f32 0.0, %v135
  %v137 = vpop.f32.mrb[0].mxu0
  %v138 = vpop.f32.mrb[0].mxu0
  %v139 = vpop.f32.mrb[0].mxu0
  %140 = vdwg.mxu0
  %v141 = vmax.f32 %v136, 0.0
  %v142 = vld [vmem:[%s2] sm:$0xff]
  %144 = vset.pattern.permute.xlu0 0
  %145 = vperm.xlu0 %144, %v142
  %v146 = vpop.permute.xlu0 %145
  %v148 = vmul.f32 %v141, %v146
  %v149 = vld [vmem:[%s3] sm:$0xff]
  %151 = vset.pattern.permute.xlu0 0
  %152 = vperm.xlu0 %151, %v149
  %v153 = vpop.permute.xlu0 %152
  %v155 = vadd.f32 %v148, %v153
  %156 = vst [vmem:[%s4] sm:$0xff] %v155
  // Predicated region
  $region18: #{_lambda_.10} parent=0 // pred_check
    _
  $region19: #{_lambda_.10} parent=0 // pred_check_branch
    %158 = sbr.rel (0) target = $region21
  $region20: #{_lambda_.10} parent=0 // pred_region
    _
  $region21: #{_lambda_.10} parent=0 // pred_fallthru
    _
  // Predicated region
  $region22: #{_lambda_.10} parent=0 // pred_check
    _
  $region23: #{_lambda_.10} parent=0 // pred_check_branch
    %160 = sbr.rel (0) target = $region25
  $region24: #{_lambda_.10} parent=0 // pred_region
    _
  $region25: #{_lambda_.10} parent=0 // pred_fallthru
    _

// kernel: _lambda_.11
$region0: #{_lambda_.11}
  #allocation0 [shape = 'u32[]', space=smem, size = 0x4, offset = 0x4, fixed_abs, tag = 'smem constant byte address 0x4 - core index']
  #allocation1 [shape = 'u32[144,128]{1,0:T(1,128)}', space=vmem, size = 0x12000, scoped, tag = 'internal scratch']
  %s0 = inlined_call_operand.vmem [shape: bf16[72,128], index: 0, kind: input, shape index: {}]
  %s1 = inlined_call_operand.vmem [shape: bf16[16,72], index: 1, kind: input, shape index: {}]
  %s2 = inlined_call_operand.vmem [shape: f32[16,1], index: 2, kind: input, shape index: {}]
  %s3 = inlined_call_operand.vmem [shape: f32[16,1], index: 3, kind: input, shape index: {}]
  %s4 = inlined_call_operand.vmem [shape: f32[16,128], index: 4, kind: output, shape index: {}]
  %s5 = sld [smem:[#allocation0]]
  $region26: #{_lambda_.11} parent=0
    _
  %s7 = ssub.s32 1, %s5
  %s8 = scalar_select 0, %s7, %s5
  // Predicated region
  $region2: #{_lambda_.11} parent=0 // pred_check
    _
  $region3: #{_lambda_.11} parent=0 // pred_check_branch
    %10 = sbr.rel (0) target = $region5
  $region4: #{_lambda_.11} parent=0 // pred_region
    _
  $region5: #{_lambda_.11} parent=0 // pred_fallthru
    _
  // Predicated region
  $region6: #{_lambda_.11} parent=0 // pred_check
    _
  $region7: #{_lambda_.11} parent=0 // pred_check_branch
    %12 = sbr.rel (0) target = $region9
  $region8: #{_lambda_.11} parent=0 // pred_region
    _
  $region9: #{_lambda_.11} parent=0 // pred_fallthru
    _
  // Predicated region
  $region10: #{_lambda_.11} parent=0 // pred_check
    _
  $region11: #{_lambda_.11} parent=0 // pred_check_branch
    %14 = sbr.rel (0) target = $region13
  $region12: #{_lambda_.11} parent=0 // pred_region
    _
  $region13: #{_lambda_.11} parent=0 // pred_fallthru
    _
  // Predicated region
  $region14: #{_lambda_.11} parent=0 // pred_check
    _
  $region15: #{_lambda_.11} parent=0 // pred_check_branch
    %16 = sbr.rel (0) target = $region17
  $region16: #{_lambda_.11} parent=0 // pred_region
    _
  $region17: #{_lambda_.11} parent=0 // pred_fallthru
    _
  %v18 = vld [vmem:[%s1] sm:$0xf]
  %v19 = vld [vmem:[%s1 + $0x4] sm:$0xf]
  %v20 = vld [vmem:[%s0] sm:$0xf]
  %v21 = vld [vmem:[%s0 + $0x4] sm:$0xf]
  %v22 = vld [vmem:[%s0 + $0x8] sm:$0xf]
  %v23 = vld [vmem:[%s0 + $0xc] sm:$0xf]
  %v24 = vld [vmem:[%s0 + $0x10] sm:$0xf]
  %v25 = vld [vmem:[%s0 + $0x14] sm:$0xf]
  %v26 = vld [vmem:[%s0 + $0x18] sm:$0xf]
  %v27 = vld [vmem:[%s0 + $0x1c] sm:$0xf]
  %v28 = vld [vmem:[%s0 + $0x20] sm:$0xf]
  %v31 = vunpack.c.l.b16 %v18
  %v32 = vunpack.c.l.b16 %v19
  %v33 = vpack.c.b16 %v32, %v31
  %v43 = vunpack.c.l.b16 %v20
  %v44 = vunpack.c.l.b16 %v21
  %v45 = vunpack.c.l.b16 %v22
  %v46 = vunpack.c.l.b16 %v23
  %v47 = vunpack.c.l.b16 %v24
  %v48 = vunpack.c.l.b16 %v25
  %v49 = vunpack.c.l.b16 %v26
  %v50 = vunpack.c.l.b16 %v27
  %v51 = vunpack.c.l.b16 %v28
  %v52 = vpack.c.b16 %v44, %v43
  %v53 = vpack.c.b16 %v46, %v45
  %v54 = vpack.c.b16 %v48, %v47
  %v55 = vpack.c.b16 %v50, %v49
  %v56 = vpack.c.b16 %v51, %v51
  %vm61 = vcmask 588800
  %v63 = vsel %vm61, %v33, 0
  %vm65 = vcmask 1043456
  %v67 = vsel %vm65, %v56, 0
  %69 = vmatprep.subr.bf16.mxu0 0
  %70 = vmatpush1.bf16.msra.mxu0 %v52
  %71 = vmatprep.subr.bf16.mxu0 0
  %72 = vmatpush1.bf16.msra.mxu0 %v53
  %73 = vmatprep.subr.bf16.mxu0 0
  %74 = vmatpush1.bf16.msra.mxu0 %v54
  %75 = vmatprep.subr.bf16.mxu0 0
  %76 = vmatpush1.bf16.msra.mxu0 %v55
  %77 = vmatprep.subr.bf16.mxu0 0
  %78 = vmatpush1.bf16.msra.mxu0 %v67
  %79 = vmatprep.subr.bf16.mxu0 0
  %80 = vmatpush1.bf16.msra.mxu0 0
  %81 = vmatprep.subr.bf16.mxu0 0
  %82 = vmatpush1.bf16.msra.mxu0 0
  %83 = vmatprep.subr.bf16.mxu0 0
  %84 = vmatpush1.bf16.msra.mxu0 0
  %85 = vmatprep.subr.bf16.mxu0 0
  %86 = vmatpush1.bf16.msra.mxu0 0
  %87 = vmatprep.subr.bf16.mxu0 0
  %88 = vmatpush1.bf16.msra.mxu0 0
  %89 = vmatprep.subr.bf16.mxu0 0
  %90 = vmatpush1.bf16.msra.mxu0 0
  %91 = vmatprep.subr.bf16.mxu0 0
  %92 = vmatpush1.bf16.msra.mxu0 0
  %93 = vmatprep.subr.bf16.mxu0 0
  %94 = vmatpush1.bf16.msra.mxu0 0
  %95 = vmatprep.subr.bf16.mxu0 0
  %96 = vmatpush1.bf16.msra.mxu0 0
  %97 = vmatprep.subr.bf16.mxu0 0
  %98 = vmatpush1.bf16.msra.mxu0 0
  %99 = vmatprep.subr.bf16.mxu0 0
  %100 = vmatpush1.bf16.msra.mxu0 0
  %101 = vmatprep.mubr.bf16.mxu0 0
  %102 = vmatmul.mubr.bf16.gmra.mrb[0].mxu0 %v63
  %v103 = vpop.f32.mrb[0].mxu0
  %v104 = vadd.f32 0.0, %v103
  %v105 = vpop.f32.mrb[0].mxu0
  %v106 = vpop.f32.mrb[0].mxu0
  %v107 = vadd.f32 0.0, %v106
  %v108 = vpop.f32.mrb[0].mxu0
  %109 = vdwg.mxu0
  %v110 = vmax.f32 %v104, 0.0
  %v111 = vmax.f32 %v107, 0.0
  %v112 = vld [vmem:[%s2] sm:$0xff]
  %v113 = vld [vmem:[%s2 + $0x8] sm:$0xff]
  %115 = vset.pattern.permute.xlu0 0
  %116 = vperm.xlu0 %115, %v112
  %v117 = vpop.permute.xlu0 %116
  %120 = vset.pattern.permute.xlu0 0
  %121 = vperm.xlu0 %120, %v113
  %v122 = vpop.permute.xlu0 %121
  %v124 = vmul.f32 %v110, %v117
  %v125 = vmul.f32 %v111, %v122
  %v126 = vld [vmem:[%s3] sm:$0xff]
  %v127 = vld [vmem:[%s3 + $0x8] sm:$0xff]
  %129 = vset.pattern.permute.xlu0 0
  %130 = vperm.xlu0 %129, %v126
  %v131 = vpop.permute.xlu0 %130
  %134 = vset.pattern.permute.xlu0 0
  %135 = vperm.xlu0 %134, %v127
  %v136 = vpop.permute.xlu0 %135
  %v138 = vadd.f32 %v124, %v131
  %v139 = vadd.f32 %v125, %v136
  %140 = vst [vmem:[%s4] sm:$0xff] %v138
  %141 = vst [vmem:[%s4 + $0x8] sm:$0xff] %v139
  // Predicated region
  $region18: #{_lambda_.11} parent=0 // pred_check
    _
  $region19: #{_lambda_.11} parent=0 // pred_check_branch
    %143 = sbr.rel (0) target = $region21
  $region20: #{_lambda_.11} parent=0 // pred_region
    _
  $region21: #{_lambda_.11} parent=0 // pred_fallthru
    _
  // Predicated region
  $region22: #{_lambda_.11} parent=0 // pred_check
    _
  $region23: #{_lambda_.11} parent=0 // pred_check_branch
    %145 = sbr.rel (0) target = $region25
  $region24: #{_lambda_.11} parent=0 // pred_region
    _
  $region25: #{_lambda_.11} parent=0 // pred_fallthru
    _

// kernel: _lambda_.13
$region0: #{_lambda_.13}
  #allocation0 [shape = 'u32[]', space=smem, size = 0x4, offset = 0x4, fixed_abs, tag = 'smem constant byte address 0x4 - core index']
  #allocation1 [shape = 'u32[144,128]{1,0:T(1,128)}', space=vmem, size = 0x12000, scoped, tag = 'internal scratch']
  %s0 = inlined_call_operand.vmem [shape: f32[16,2], index: 0, kind: input, shape index: {}]
  %s1 = inlined_call_operand.vmem [shape: f32[10,16], index: 1, kind: input, shape index: {}]
  %s2 = inlined_call_operand.vmem [shape: f32[10,2], index: 2, kind: output, shape index: {}]
  %s3 = sld [smem:[#allocation0]]
  $region18: #{_lambda_.13} parent=0
    _
  %s5 = ssub.s32 1, %s3
  %s6 = scalar_select 0, %s5, %s3
  // Predicated region
  $region2: #{_lambda_.13} parent=0 // pred_check
    _
  $region3: #{_lambda_.13} parent=0 // pred_check_branch
    %8 = sbr.rel (0) target = $region5
  $region4: #{_lambda_.13} parent=0 // pred_region
    _
  $region5: #{_lambda_.13} parent=0 // pred_fallthru
    _
  // Predicated region
  $region6: #{_lambda_.13} parent=0 // pred_check
    _
  $region7: #{_lambda_.13} parent=0 // pred_check_branch
    %10 = sbr.rel (0) target = $region9
  $region8: #{_lambda_.13} parent=0 // pred_region
    _
  $region9: #{_lambda_.13} parent=0 // pred_fallthru
    _
  %v11 = vld [vmem:[%s1] sm:$0xff]
  %v12 = vld [vmem:[%s1 + $0x8] sm:$0x3]
  %v13 = vld [vmem:[%s0] sm:$0xff]
  %v14 = vld [vmem:[%s0 + $0x8] sm:$0xff]
  %vm15 = vcmask 130048
  %v17 = vsel %vm15, %v11, 0
  %v20 = vsel %vm15, %v12, 0
  %22 = vmatprep.subr.mxu0 0.0
  %23 = vmatpush1.msra.mxu0 %v13
  %24 = vmatprep.subr.mxu0 0.0
  %25 = vmatpush1.msra.mxu0 %v14
  %26 = vmatprep.subr.mxu0 0.0
  %27 = vmatpush1.msra.mxu0 0.0
  %28 = vmatprep.subr.mxu0 0.0
  %29 = vmatpush1.msra.mxu0 0.0
  %30 = vmatprep.subr.mxu0 0.0
  %31 = vmatpush1.msra.mxu0 0.0
  %32 = vmatprep.subr.mxu0 0.0
  %33 = vmatpush1.msra.mxu0 0.0
  %34 = vmatprep.subr.mxu0 0.0
  %35 = vmatpush1.msra.mxu0 0.0
  %36 = vmatprep.subr.mxu0 0.0
  %37 = vmatpush1.msra.mxu0 0.0
  %38 = vmatprep.subr.mxu0 0.0
  %39 = vmatpush1.msra.mxu0 0.0
  %40 = vmatprep.subr.mxu0 0.0
  %41 = vmatpush1.msra.mxu0 0.0
  %42 = vmatprep.subr.mxu0 0.0
  %43 = vmatpush1.msra.mxu0 0.0
  %44 = vmatprep.subr.mxu0 0.0
  %45 = vmatpush1.msra.mxu0 0.0
  %46 = vmatprep.subr.mxu0 0.0
  %47 = vmatpush1.msra.mxu0 0.0
  %48 = vmatprep.subr.mxu0 0.0
  %49 = vmatpush1.msra.mxu0 0.0
  %50 = vmatprep.subr.mxu0 0.0
  %51 = vmatpush1.msra.mxu0 0.0
  %52 = vmatprep.subr.mxu0 0.0
  %53 = vmatpush1.msra.mxu0 0.0
  %54 = vmatprep.subr.mxu0 0.0
  %55 = vmatpush1.msra.mxu0 0.0
  %56 = vmatprep.subr.mxu0 0.0
  %57 = vmatpush1.msra.mxu0 0.0
  %58 = vmatprep.subr.mxu0 0.0
  %59 = vmatpush1.msra.mxu0 0.0
  %60 = vmatprep.subr.mxu0 0.0
  %61 = vmatpush1.msra.mxu0 0.0
  %62 = vmatprep.subr.mxu0 0.0
  %63 = vmatpush1.msra.mxu0 0.0
  %64 = vmatprep.subr.mxu0 0.0
  %65 = vmatpush1.msra.mxu0 0.0
  %66 = vmatprep.subr.mxu0 0.0
  %67 = vmatpush1.msra.mxu0 0.0
  %68 = vmatprep.subr.mxu0 0.0
  %69 = vmatpush1.msra.mxu0 0.0
  %70 = vmatprep.subr.mxu0 0.0
  %71 = vmatpush1.msra.mxu0 0.0
  %72 = vmatprep.subr.mxu0 0.0
  %73 = vmatpush1.msra.mxu0 0.0
  %74 = vmatprep.subr.mxu0 0.0
  %75 = vmatpush1.msra.mxu0 0.0
  %76 = vmatprep.subr.mxu0 0.0
  %77 = vmatpush1.msra.mxu0 0.0
  %78 = vmatprep.subr.mxu0 0.0
  %79 = vmatpush1.msra.mxu0 0.0
  %80 = vmatprep.subr.mxu0 0.0
  %81 = vmatpush1.msra.mxu0 0.0
  %82 = vmatprep.subr.mxu0 0.0
  %83 = vmatpush1.msra.mxu0 0.0
  %84 = vmatprep.subr.mxu0 0.0
  %85 = vmatpush1.msra.mxu0 0.0
  %86 = vmatprep.mubr.f32.mxu0 0.0
  %87 = vmatmul.mubr.f32.gmra.mrb[0].mxu0 %v17
  %v88 = vpop.f32.mrb[0].mxu0
  %v89 = vadd.f32 0.0, %v88
  %v90 = vpop.f32.mrb[0].mxu0
  %91 = vmatprep.mubr.f32.mxu0 0.0
  %92 = vmatmul.mubr.f32.gmra.mrb[0].mxu0 %v20
  %v93 = vpop.f32.mrb[0].mxu0
  %v94 = vadd.f32 0.0, %v93
  %v95 = vpop.f32.mrb[0].mxu0
  %96 = vdwg.mxu0
  %vm97 = vcmask 15360
  %v98 = vsel %vm97, %v89, -inf
  %vm99 = vcmask 9216
  %v100 = vsel %vm99, %v94, -inf
  %v101 = vmax.f32 %v98, %v100
  %v102 = vrot.slane %v101, 4
  %v103 = vmax.f32 %v101, %v102
  %v104 = vrot.slane %v103, 2
  %v105 = vmax.f32 %v103, %v104
  %v106 = vrot.slane %v105, 1
  %v107 = vmax.f32 %v105, %v106
  %v108 = vsub.f32 %v89, %v107
  %v109 = vsub.f32 %v94, %v107
  %v110 = vmul.f32 %v108, 1.442695
  %v111 = vpow.pop %v110
  %v112 = vmul.f32 %v109, 1.442695
  %v113 = vpow.pop %v112
  %v114 = vsel %vm97, %v111, 0.0
  %v115 = vsel %vm99, %v113, 0.0
  %v116 = vadd.f32 %v114, %v115
  %v117 = vrot.slane %v116, 4
  %v118 = vadd.f32 %v116, %v117
  %v119 = vrot.slane %v118, 2
  %v120 = vadd.f32 %v118, %v119
  %v121 = vrot.slane %v120, 1
  %v122 = vadd.f32 %v120, %v121
  %v123 = vlog2.pop %v122
  %v124 = vmul.f32 %v123, 0.6931472
  %v125 = vsub.f32 %v108, %v124
  %v126 = vsub.f32 %v109, %v124
  %127 = vst.msk [vmem:[%s2] sm:$0xff] %vm97, %v125
  %128 = vst.msk [vmem:[%s2 + $0x8] sm:$0x3] %vm99, %v126
  // Predicated region
  $region10: #{_lambda_.13} parent=0 // pred_check
    _
  $region11: #{_lambda_.13} parent=0 // pred_check_branch
    %130 = sbr.rel (0) target = $region13
  $region12: #{_lambda_.13} parent=0 // pred_region
    _
  $region13: #{_lambda_.13} parent=0 // pred_fallthru
    _
  // Predicated region
  $region14: #{_lambda_.13} parent=0 // pred_check
    _
  $region15: #{_lambda_.13} parent=0 // pred_check_branch
    %132 = sbr.rel (0) target = $region17
  $region16: #{_lambda_.13} parent=0 // pred_region
    _
  $region17: #{_lambda_.13} parent=0 // pred_fallthru
    _

// kernel: _lambda_.12
$region0: #{_lambda_.12}
  #allocation0 [shape = 'u32[]', space=smem, size = 0x4, offset = 0x4, fixed_abs, tag = 'smem constant byte address 0x4 - core index']
  #allocation1 [shape = 'u32[144,128]{1,0:T(1,128)}', space=vmem, size = 0x12000, scoped, tag = 'internal scratch']
  %s0 = inlined_call_operand.vmem [shape: bf16[144,128], index: 0, kind: input, shape index: {}]
  %s1 = inlined_call_operand.vmem [shape: bf16[16,144], index: 1, kind: input, shape index: {}]
  %s2 = inlined_call_operand.vmem [shape: f32[16,1], index: 2, kind: input, shape index: {}]
  %s3 = inlined_call_operand.vmem [shape: f32[16,1], index: 3, kind: input, shape index: {}]
  %s4 = inlined_call_operand.vmem [shape: f32[16,128], index: 4, kind: output, shape index: {}]
  %s5 = sld [smem:[#allocation0]]
  $region26: #{_lambda_.12} parent=0
    _
  %s7 = ssub.s32 1, %s5
  %s8 = scalar_select 0, %s7, %s5
  // Predicated region
  $region2: #{_lambda_.12} parent=0 // pred_check
    _
  $region3: #{_lambda_.12} parent=0 // pred_check_branch
    %10 = sbr.rel (0) target = $region5
  $region4: #{_lambda_.12} parent=0 // pred_region
    _
  $region5: #{_lambda_.12} parent=0 // pred_fallthru
    _
  // Predicated region
  $region6: #{_lambda_.12} parent=0 // pred_check
    _
  $region7: #{_lambda_.12} parent=0 // pred_check_branch
    %12 = sbr.rel (0) target = $region9
  $region8: #{_lambda_.12} parent=0 // pred_region
    _
  $region9: #{_lambda_.12} parent=0 // pred_fallthru
    _
  // Predicated region
  $region10: #{_lambda_.12} parent=0 // pred_check
    _
  $region11: #{_lambda_.12} parent=0 // pred_check_branch
    %14 = sbr.rel (0) target = $region13
  $region12: #{_lambda_.12} parent=0 // pred_region
    _
  $region13: #{_lambda_.12} parent=0 // pred_fallthru
    _
  // Predicated region
  $region14: #{_lambda_.12} parent=0 // pred_check
    _
  $region15: #{_lambda_.12} parent=0 // pred_check_branch
    %16 = sbr.rel (0) target = $region17
  $region16: #{_lambda_.12} parent=0 // pred_region
    _
  $region17: #{_lambda_.12} parent=0 // pred_fallthru
    _
  %v18 = vld [vmem:[%s1] sm:$0xff]
  %v19 = vld [vmem:[%s1 + $0x8] sm:$0xff]
  %v20 = vld [vmem:[%s0] sm:$0xf]
  %v21 = vld [vmem:[%s0 + $0x4] sm:$0xf]
  %v22 = vld [vmem:[%s0 + $0x8] sm:$0xf]
  %v23 = vld [vmem:[%s0 + $0xc] sm:$0xf]
  %v24 = vld [vmem:[%s0 + $0x10] sm:$0xf]
  %v25 = vld [vmem:[%s0 + $0x14] sm:$0xf]
  %v26 = vld [vmem:[%s0 + $0x18] sm:$0xf]
  %v27 = vld [vmem:[%s0 + $0x1c] sm:$0xf]
  %v28 = vld [vmem:[%s0 + $0x20] sm:$0xf]
  %v29 = vld [vmem:[%s0 + $0x24] sm:$0xf]
  %v30 = vld [vmem:[%s0 + $0x28] sm:$0xf]
  %v31 = vld [vmem:[%s0 + $0x2c] sm:$0xf]
  %v32 = vld [vmem:[%s0 + $0x30] sm:$0xf]
  %v33 = vld [vmem:[%s0 + $0x34] sm:$0xf]
  %v34 = vld [vmem:[%s0 + $0x38] sm:$0xf]
  %v35 = vld [vmem:[%s0 + $0x3c] sm:$0xf]
  %v36 = vld [vmem:[%s0 + $0x40] sm:$0xf]
  %v37 = vld [vmem:[%s0 + $0x44] sm:$0xf]
  %v40 = vunpack.c.l.b16 %v18
  %v41 = vunpack.c.h.b16 %v18
  %v42 = vunpack.c.l.b16 %v19
  %v43 = vunpack.c.h.b16 %v19
  %v44 = vpack.c.b16 %v42, %v40
  %v45 = vpack.c.b16 %v43, %v41
  %v65 = vunpack.c.l.b16 %v20
  %v66 = vunpack.c.l.b16 %v21
  %v67 = vunpack.c.l.b16 %v22
  %v68 = vunpack.c.l.b16 %v23
  %v69 = vunpack.c.l.b16 %v24
  %v70 = vunpack.c.l.b16 %v25
  %v71 = vunpack.c.l.b16 %v26
  %v72 = vunpack.c.l.b16 %v27
  %v73 = vunpack.c.l.b16 %v28
  %v74 = vunpack.c.l.b16 %v29
  %v75 = vunpack.c.l.b16 %v30
  %v76 = vunpack.c.l.b16 %v31
  %v77 = vunpack.c.l.b16 %v32
  %v78 = vunpack.c.l.b16 %v33
  %v79 = vunpack.c.l.b16 %v34
  %v80 = vunpack.c.l.b16 %v35
  %v81 = vunpack.c.l.b16 %v36
  %v82 = vunpack.c.l.b16 %v37
  %v83 = vpack.c.b16 %v66, %v65
  %v84 = vpack.c.b16 %v68, %v67
  %v85 = vpack.c.b16 %v70, %v69
  %v86 = vpack.c.b16 %v72, %v71
  %v87 = vpack.c.b16 %v74, %v73
  %v88 = vpack.c.b16 %v76, %v75
  %v89 = vpack.c.b16 %v78, %v77
  %v90 = vpack.c.b16 %v80, %v79
  %v91 = vpack.c.b16 %v82, %v81
  %vm101 = vcmask 130048
  %v103 = vsel %vm101, %v45, 0
  %105 = vmatprep.subr.bf16.mxu0 0
  %106 = vmatpush1.bf16.msra.mxu0 %v83
  %107 = vmatprep.subr.bf16.mxu0 0
  %108 = vmatpush1.bf16.msra.mxu0 %v84
  %109 = vmatprep.subr.bf16.mxu0 0
  %110 = vmatpush1.bf16.msra.mxu0 %v85
  %111 = vmatprep.subr.bf16.mxu0 0
  %112 = vmatpush1.bf16.msra.mxu0 %v86
  %113 = vmatprep.subr.bf16.mxu0 0
  %114 = vmatpush1.bf16.msra.mxu0 %v87
  %115 = vmatprep.subr.bf16.mxu0 0
  %116 = vmatpush1.bf16.msra.mxu0 %v88
  %117 = vmatprep.subr.bf16.mxu0 0
  %118 = vmatpush1.bf16.msra.mxu0 %v89
  %119 = vmatprep.subr.bf16.mxu0 0
  %120 = vmatpush1.bf16.msra.mxu0 %v90
  %121 = vmatprep.subr.bf16.mxu0 0
  %122 = vmatpush1.bf16.msra.mxu0 %v91
  %123 = vmatprep.subr.bf16.mxu0 0
  %124 = vmatpush1.bf16.msra.mxu0 0
  %125 = vmatprep.subr.bf16.mxu0 0
  %126 = vmatpush1.bf16.msra.mxu0 0
  %127 = vmatprep.subr.bf16.mxu0 0
  %128 = vmatpush1.bf16.msra.mxu0 0
  %129 = vmatprep.subr.bf16.mxu0 0
  %130 = vmatpush1.bf16.msra.mxu0 0
  %131 = vmatprep.subr.bf16.mxu0 0
  %132 = vmatpush1.bf16.msra.mxu0 0
  %133 = vmatprep.subr.bf16.mxu0 0
  %134 = vmatpush1.bf16.msra.mxu0 0
  %135 = vmatprep.subr.bf16.mxu0 0
  %136 = vmatpush1.bf16.msra.mxu0 0
  %137 = vmatprep.mubr.bf16.mxu0 %v103
  %138 = vmatmul.mubr.bf16.gmra.mrb[0].mxu0 %v44
  %v139 = vpop.f32.mrb[0].mxu0
  %v140 = vadd.f32 0.0, %v139
  %v141 = vpop.f32.mrb[0].mxu0
  %v142 = vpop.f32.mrb[0].mxu0
  %v143 = vadd.f32 0.0, %v142
  %v144 = vpop.f32.mrb[0].mxu0
  %145 = vdwg.mxu0
  %v146 = vmax.f32 %v140, 0.0
  %v147 = vmax.f32 %v143, 0.0
  %v148 = vld [vmem:[%s2] sm:$0xff]
  %v149 = vld [vmem:[%s2 + $0x8] sm:$0xff]
  %151 = vset.pattern.permute.xlu0 0
  %152 = vperm.xlu0 %151, %v148
  %v153 = vpop.permute.xlu0 %152
  %156 = vset.pattern.permute.xlu0 0
  %157 = vperm.xlu0 %156, %v149
  %v158 = vpop.permute.xlu0 %157
  %v160 = vmul.f32 %v146, %v153
  %v161 = vmul.f32 %v147, %v158
  %v162 = vld [vmem:[%s3] sm:$0xff]
  %v163 = vld [vmem:[%s3 + $0x8] sm:$0xff]
  %165 = vset.pattern.permute.xlu0 0
  %166 = vperm.xlu0 %165, %v162
  %v167 = vpop.permute.xlu0 %166
  %170 = vset.pattern.permute.xlu0 0
  %171 = vperm.xlu0 %170, %v163
  %v172 = vpop.permute.xlu0 %171
  %v174 = vadd.f32 %v160, %v167
  %v175 = vadd.f32 %v161, %v172
  %176 = vst [vmem:[%s4] sm:$0xff] %v174
  %177 = vst [vmem:[%s4 + $0x8] sm:$0xff] %v175
  // Predicated region
  $region18: #{_lambda_.12} parent=0 // pred_check
    _
  $region19: #{_lambda_.12} parent=0 // pred_check_branch
    %179 = sbr.rel (0) target = $region21
  $region20: #{_lambda_.12} parent=0 // pred_region
    _
  $region21: #{_lambda_.12} parent=0 // pred_fallthru
    _
  // Predicated region
  $region22: #{_lambda_.12} parent=0 // pred_check
    _
  $region23: #{_lambda_.12} parent=0 // pred_check_branch
    %181 = sbr.rel (0) target = $region25
  $region24: #{_lambda_.12} parent=0 // pred_region
    _
  $region25: #{_lambda_.12} parent=0 // pred_fallthru
    _

</llo_original>
